<compile_context>
chip_gen: v7x
topology: tpu7x:2x2x1
jax: 0.10.0
libtpu: 0.0.40
codegen_flags: <defaults>
</compile_context>

<pallas_src>
import functools

import jax
import jax.numpy as jnp
from jax import lax
from jax.experimental import pallas as pl
from jax.experimental.pallas import tpu as pltpu

EPS_EDIT = 1e-7     # matches `edit_direction.norm(...) + 1e-07`
EPS_COS = 1e-8      # torch.nn.CosineSimilarity eps
TINY = 1e-30        # below f32 resolution for any non-degenerate row; guards rsqrt(0)

VMEM_LIMIT_BYTES = 32 * 1024 * 1024   # safe scoped-VMEM cap on v5e/v6e/v7x
VMEM_TILE_BUDGET = 16 * 1024 * 1024   # target working set (fits limit with 2x headroom)
_ASSUMED_ROWS = 64                    # conservative per-side padded-batch for sizing
_ASSUMED_TXT = 64                     # conservative text-row count for sizing


def _round_up(x, m):
    return (x + m - 1) // m * m


def _tiled_footprint_bytes(b_pad, tk, e_pad, n_txt):
    """Conservative VMEM working set: double-buffered inputs + f32 accumulators."""
    dbuf_inputs = 2 * (2 * b_pad * tk * 2          # src_x + tgt_x tiles (bf16)
                       + tk * e_pad * 2            # W tile (bf16)
                       + 2 * n_txt * e_pad * 4)    # src/tgt text rows (f32)
    accumulators = 2 * b_pad * e_pad * 4           # src/tgt f32 feature accumulators
    return dbuf_inputs + accumulators


# ----------------------------------------------------------------------------
# Shared epilogue: L2-norm features -> directional cosine loss (torch semantics)
# ----------------------------------------------------------------------------
def _directional_loss(src_feats, tgt_feats, src_txt, tgt_txt, *, n_txt, b_real):
    # image_features / image_features.norm(dim=-1)  (rsqrt -> EUP slot)
    src_f = src_feats * lax.rsqrt(
        jnp.sum(src_feats * src_feats, axis=-1, keepdims=True) + TINY)
    tgt_f = tgt_feats * lax.rsqrt(
        jnp.sum(tgt_feats * tgt_feats, axis=-1, keepdims=True) + TINY)

    # target_direction = normalize(mean(tgt_txt - src_txt, axis=0))
    diff = tgt_txt - src_txt
    tdir = jnp.sum(diff, axis=0, keepdims=True) * (1.0 / n_txt)
    tdir = tdir * lax.rsqrt(jnp.sum(tdir * tdir, axis=-1, keepdims=True) + TINY)

    # edit_direction = (tgt - src) / (||tgt - src|| + 1e-7)   (divide -> EUP)
    edit = tgt_f - src_f
    enorm = jnp.sqrt(jnp.sum(edit * edit, axis=-1, keepdims=True))
    edit = edit * pl.reciprocal(enorm + EPS_EDIT, approx=True)

    # torch.nn.CosineSimilarity(dim=1): dot / max(||x|| * ||y||, 1e-8)
    xnorm = jnp.sqrt(jnp.sum(edit * edit, axis=-1, keepdims=True))
    ynorm = jnp.sqrt(jnp.sum(tdir * tdir, axis=-1, keepdims=True))
    denom = jnp.maximum(xnorm * ynorm, EPS_COS)
    cos = (jnp.sum(edit * tdir, axis=-1, keepdims=True)
           * pl.reciprocal(denom, approx=True))

    # mask zero-padded batch rows, mean over the B real rows
    row = lax.broadcasted_iota(jnp.int32, (src_feats.shape[0], 1), 0)
    per_row = jnp.where(row < b_real, 1.0 - cos, 0.0)
    return jnp.sum(per_row) * (1.0 / b_real)


# ----------------------------------------------------------------------------
# Kernels
#   Resident path: grid=(1,), everything VMEM-resident, no scratch/accumulator.
#   Tiled path   : grid=(V_pad//tk,) K reduction, separate src/tgt f32 accumulators.
# ----------------------------------------------------------------------------
def _clip_dir_resident_kernel(src_x_ref, tgt_x_ref, w_ref, src_t_ref, tgt_t_ref,
                              loss_ref, *, n_txt, b_real):
    w = w_ref[...]                                              # (V_pad, E_pad) bf16
    src_feats = jnp.dot(src_x_ref[...], w, preferred_element_type=jnp.float32)
    tgt_feats = jnp.dot(tgt_x_ref[...], w, preferred_element_type=jnp.float32)
    loss_ref[0, 0] = _directional_loss(src_feats, tgt_feats,
                                       src_t_ref[...], tgt_t_ref[...],
                                       n_txt=n_txt, b_real=b_real)


def _clip_dir_tiled_kernel(src_x_ref, tgt_x_ref, w_ref, src_t_ref, tgt_t_ref,
                           loss_ref, src_acc, tgt_acc, *, n_txt, b_real):
    k = pl.program_id(0)

    @pl.when(k == 0)
    def _():
        src_acc[...] = jnp.zeros_like(src_acc)
        tgt_acc[...] = jnp.zeros_like(tgt_acc)

    w = w_ref[...]                                              # (tk, E_pad) bf16
    src_acc[...] += jnp.dot(src_x_ref[...], w, preferred_element_type=jnp.float32)
    tgt_acc[...] += jnp.dot(tgt_x_ref[...], w, preferred_element_type=jnp.float32)

    @pl.when(k == pl.num_programs(0) - 1)
    def _():
        loss_ref[0, 0] = _directional_loss(src_acc[...], tgt_acc[...],
                                           src_t_ref[...], tgt_t_ref[...],
                                           n_txt=n_txt, b_real=b_real)


def clip_directional_loss_fused(src_x, tgt_x, w_bf16, src_txt, tgt_txt, *,
                                b_real, tk):
    b_pad, v_pad = src_x.shape
    e_pad = w_bf16.shape[1]
    n_txt = src_txt.shape[0]
    n_k = v_pad // tk

    x_spec = pl.BlockSpec((b_pad, tk), lambda k: (0, k))
    w_spec = pl.BlockSpec((tk, e_pad), lambda k: (k, 0))
    t_spec = pl.BlockSpec((n_txt, e_pad), lambda k: (0, 0))
    out_spec = pl.BlockSpec(memory_space=pltpu.MemorySpace.SMEM)  # scalar loss

    if n_k == 1:
        kernel = functools.partial(_clip_dir_resident_kernel,
                                   n_txt=n_txt, b_real=b_real)
        scratch = []
    else:
        kernel = functools.partial(_clip_dir_tiled_kernel,
                                   n_txt=n_txt, b_real=b_real)
        scratch = [pltpu.VMEM((b_pad, e_pad), jnp.float32),
                   pltpu.VMEM((b_pad, e_pad), jnp.float32)]

    out = pl.pallas_call(
        kernel,
        out_shape=jax.ShapeDtypeStruct((1, 1), jnp.float32),
        grid_spec=pltpu.PrefetchScalarGridSpec(
            num_scalar_prefetch=0,
            grid=(n_k,),
            in_specs=[x_spec, x_spec, w_spec, t_spec, t_spec],
            out_specs=out_spec,
            scratch_shapes=scratch,
        ),
        compiler_params=pltpu.CompilerParams(
            dimension_semantics=("arbitrary",),      # K is a reduction axis
            vmem_limit_bytes=VMEM_LIMIT_BYTES,
        ),
    )(src_x, tgt_x, w_bf16, src_txt, tgt_txt)
    return out[0, 0]


# ----------------------------------------------------------------------------
# CLIPLoss wrapper (glue / padding in plain JAX, fused under jit)
# ----------------------------------------------------------------------------
class CLIPLoss:
    def __init__(self, crop_size, feat_dim, key,
                 lambda_direction=1.0, lambda_global=0.0, lambda_manifold=0.0):
        self.crop_size = crop_size
        self.feat_dim = feat_dim
        self.lambda_direction = lambda_direction
        self.lambda_global = lambda_global
        self.lambda_manifold = lambda_manifold

        vol = crop_size ** 3
        self.v = vol
        self.e_pad = _round_up(feat_dim, 128)

        # K tiling: fully VMEM-resident single block when it fits the budget
        # (no reduction grid / accumulator at all); otherwise the largest K tile
        # (1024 preferred, 128 floor) whose double-buffered working set fits,
        # with V padded up to a multiple of the chosen tile.
        v_pad_full = _round_up(vol, 128)
        if _tiled_footprint_bytes(_ASSUMED_ROWS, v_pad_full, self.e_pad,
                                  _ASSUMED_TXT) <= VMEM_TILE_BUDGET:
            self.tk = v_pad_full
        else:
            self.tk = next(
                (t for t in (1024, 512, 256, 128)
                 if _tiled_footprint_bytes(_ASSUMED_ROWS, t, self.e_pad,
                                           _ASSUMED_TXT) <= VMEM_TILE_BUDGET),
                128)
        self.v_pad = _round_up(vol, self.tk)

        # deterministic synthetic encoder weight (stand-in for CLIP RN50)
        self.enc_w = (jax.random.normal(key, (vol, feat_dim), jnp.float32)
                      / jnp.sqrt(jnp.float32(vol)))
        w_pad = jnp.zeros((self.v_pad, self.e_pad), jnp.float32)
        w_pad = w_pad.at[:vol, :feat_dim].set(self.enc_w)
        self.enc_w_bf16 = w_pad.astype(jnp.bfloat16)

    def crop_img(self, images):
        # images: (B, H, W, D), center crop (same as torch crop_img)
        c = self.crop_size
        H, W, D = images.shape[1], images.shape[2], images.shape[3]
        sh, sw, sd = (H - c) // 2, (W - c) // 2, (D - c) // 2
        return images[:, sh:sh + c, sw:sw + c, sd:sd + c]

    def _prep_image_rows(self, img):
        # crop + flatten + pad (fused by XLA under jit, no extra eager HBM copy)
        images = img.astype(jnp.float32)
        images = images.reshape(images.shape[-4], images.shape[-3],
                                images.shape[-2], images.shape[-1])
        images = self.crop_img(images)
        x = images.reshape(images.shape[0], -1)                 # (B, V)
        B = x.shape[0]
        b_pad = _round_up(B, 8)
        x = jnp.pad(x, ((0, b_pad - B), (0, self.v_pad - self.v)))
        return x.astype(jnp.bfloat16), B, b_pad

    @staticmethod
    def encode_text(seq):
        return jnp.squeeze(seq, axis=1)                         # (N, 1, E) -> (N, E)

    def _prep_text(self, seq):
        t = self.encode_text(seq).astype(jnp.float32)
        return jnp.pad(t, ((0, 0), (0, self.e_pad - self.feat_dim)))

    def clip_directional_loss(self, src_img, src_seq, tgt_img, tgt_seq):
        # src/tgt image rows stay as two separate kernel inputs (no HBM concat)
        src_x, B, _ = self._prep_image_rows(src_img)
        tgt_x, _, _ = self._prep_image_rows(tgt_img)
        src_txt = self._prep_text(src_seq)
        tgt_txt = self._prep_text(tgt_seq)
        return clip_directional_loss_fused(
            src_x, tgt_x, self.enc_w_bf16, src_txt, tgt_txt,
            b_real=B, tk=self.tk)

    def __call__(self, src_img, src_seq, tgt_img, tgt_seq):
        clip_loss = jnp.float32(0.0)
        if self.lambda_global:
            pass  # TODO(synk): global_clip_loss path disabled (default lambda_global=0)
        if self.lambda_direction:
            clip_loss = clip_loss + self.lambda_direction * \
                self.clip_directional_loss(src_img, src_seq, tgt_img, tgt_seq)
        if self.lambda_manifold:
            pass  # TODO(synk): clip_angle_loss path disabled (default lambda_manifold=0)
        return clip_loss


# ----------------------------------------------------------------------------
# Pure-JAX reference (same synthetic encoder, same bf16 feature matmul)
# ----------------------------------------------------------------------------
def _reference_loss(mod, src_img, src_seq, tgt_img, tgt_seq):
    def feat(img):
        images = mod.crop_img(img.astype(jnp.float32))
        x = images.reshape(images.shape[0], -1).astype(jnp.bfloat16)
        w = mod.enc_w.astype(jnp.bfloat16)
        f = jnp.dot(x, w, preferred_element_type=jnp.float32)
        return f / jnp.linalg.norm(f, axis=-1, keepdims=True)

    src_f, tgt_f = feat(src_img), feat(tgt_img)
    src_t, tgt_t = jnp.squeeze(src_seq, 1), jnp.squeeze(tgt_seq, 1)
    tdir = jnp.mean(tgt_t - src_t, axis=0, keepdims=True)
    tdir = tdir / jnp.linalg.norm(tdir, axis=-1, keepdims=True)
    edit = tgt_f - src_f
    edit = edit / (jnp.linalg.norm(edit, axis=-1, keepdims=True) + EPS_EDIT)
    num = jnp.sum(edit * tdir, axis=-1)
    den = jnp.maximum(jnp.linalg.norm(edit, axis=-1)
                      * jnp.linalg.norm(tdir, axis=-1), EPS_COS)
    cos = num / den
    return jnp.mean(1.0 - cos)


if __name__ == "__main__":
    key = jax.random.PRNGKey(0)
    k_img_s, k_img_t, k_txt_s, k_txt_t, k_w = jax.random.split(key, 5)

    B, H, W, D = 2, 16, 16, 16     # small volumetric images (B, H, W, D)
    N, E = 8, 32                   # text: (N, 1, E)
    CROP = 12                      # V = 1728 -> padded to 1792; resident single block

    src_img = jax.random.normal(k_img_s, (B, H, W, D), jnp.float32)
    tgt_img = jax.random.normal(k_img_t, (B, H, W, D), jnp.float32)
    src_seq = jax.random.normal(k_txt_s, (N, 1, E), jnp.float32)
    tgt_seq = jax.random.normal(k_txt_t, (N, 1, E), jnp.float32)

    loss_mod = CLIPLoss(crop_size=CROP, feat_dim=E, key=k_w, lambda_direction=1.0)

    fwd = jax.jit(lambda a, b, c, d: loss_mod(a, b, c, d))
    out = fwd(src_img, src_seq, tgt_img, tgt_seq)
    jax.block_until_ready(out)

    ref = _reference_loss(loss_mod, src_img, src_seq, tgt_img, tgt_seq)
    assert out.shape == () and bool(jnp.isfinite(out))
    assert float(jnp.abs(out - ref)) < 1e-2, (float(out), float(ref))
    print("KERNEL_OK")
</pallas_src>

<mosaic_0001>
module attributes {stable_mosaic.version = 11 : i64} {
  func.func @_clip_dir_resident_kernel(%arg0: i32, %arg1: memref<8x1792xbf16, #tpu.memory_space<vmem>>, %arg2: memref<8x1792xbf16, #tpu.memory_space<vmem>>, %arg3: memref<1792x128xbf16, #tpu.memory_space<vmem>>, %arg4: memref<8x128xf32, #tpu.memory_space<vmem>>, %arg5: memref<8x128xf32, #tpu.memory_space<vmem>>, %arg6: memref<1x1xf32, #tpu.memory_space<smem>>) attributes {dimension_semantics = [#tpu.dimension_semantics<arbitrary>], iteration_bounds = array<i64: 1>, scalar_prefetch = 0 : i64, scratch_operands = 0 : i64, tpu.core_type = #tpu.core_type<tc>, window_params = [{transform_indices = @transform_0, window_bounds = array<i64: 8, 1792>}, {transform_indices = @transform_1, window_bounds = array<i64: 8, 1792>}, {transform_indices = @transform_2, window_bounds = array<i64: 1792, 128>}, {pipeline_mode = #tpu.pipeline_mode<synchronous>, transform_indices = @transform_3, window_bounds = array<i64: 8, 128>}, {pipeline_mode = #tpu.pipeline_mode<synchronous>, transform_indices = @transform_4, window_bounds = array<i64: 8, 128>}, {transform_indices = @transform_5, window_bounds = array<i64: 1, 1>}]} {
    %c0 = arith.constant 0 : index
    %c0_0 = arith.constant 0 : index
    %0 = vector.load %arg3[%c0, %c0_0] : memref<1792x128xbf16, #tpu.memory_space<vmem>>, vector<1792x128xbf16>
    %c0_1 = arith.constant 0 : index
    %c0_2 = arith.constant 0 : index
    %1 = vector.load %arg1[%c0_1, %c0_2] : memref<8x1792xbf16, #tpu.memory_space<vmem>>, vector<8x1792xbf16>
    %cst = arith.constant dense<0.000000e+00> : vector<8x128xf32>
    %2 = tpu.matmul %1, %0, %cst {dimension_numbers = #tpu.dot_dimension_numbers<[1], [0], [0], [1], [0, 0, 1, 1], [], []>} : vector<8x1792xbf16>, vector<1792x128xbf16>, vector<8x128xf32> -> vector<8x128xf32>
    %c0_3 = arith.constant 0 : index
    %c0_4 = arith.constant 0 : index
    %3 = vector.load %arg2[%c0_3, %c0_4] : memref<8x1792xbf16, #tpu.memory_space<vmem>>, vector<8x1792xbf16>
    %cst_5 = arith.constant dense<0.000000e+00> : vector<8x128xf32>
    %4 = tpu.matmul %3, %0, %cst_5 {dimension_numbers = #tpu.dot_dimension_numbers<[1], [0], [0], [1], [0, 0, 1, 1], [], []>} : vector<8x1792xbf16>, vector<1792x128xbf16>, vector<8x128xf32> -> vector<8x128xf32>
    %c0_6 = arith.constant 0 : index
    %c0_7 = arith.constant 0 : index
    %5 = vector.load %arg4[%c0_6, %c0_7] : memref<8x128xf32, #tpu.memory_space<vmem>>, vector<8x128xf32>
    %c0_8 = arith.constant 0 : index
    %c0_9 = arith.constant 0 : index
    %6 = vector.load %arg5[%c0_8, %c0_9] : memref<8x128xf32, #tpu.memory_space<vmem>>, vector<8x128xf32>
    %7 = arith.mulf %2, %2 : vector<8x128xf32>
    %cst_10 = arith.constant dense<0.000000e+00> : vector<8xf32>
    %8 = vector.multi_reduction <add>, %7, %cst_10 [1] : vector<8x128xf32> to vector<8xf32>
    %9 = vector.shape_cast %8 : vector<8xf32> to vector<8x1xf32>
    %cst_11 = arith.constant 1.000000e-30 : f32
    %10 = vector.broadcast %cst_11 : f32 to vector<8x1xf32>
    %11 = arith.addf %9, %10 : vector<8x1xf32>
    %12 = math.rsqrt %11 : vector<8x1xf32>
    %13 = vector.broadcast %12 : vector<8x1xf32> to vector<8x128xf32>
    %14 = arith.mulf %2, %13 : vector<8x128xf32>
    %15 = arith.mulf %4, %4 : vector<8x128xf32>
    %cst_12 = arith.constant dense<0.000000e+00> : vector<8xf32>
    %16 = vector.multi_reduction <add>, %15, %cst_12 [1] : vector<8x128xf32> to vector<8xf32>
    %17 = vector.shape_cast %16 : vector<8xf32> to vector<8x1xf32>
    %cst_13 = arith.constant 1.000000e-30 : f32
    %18 = vector.broadcast %cst_13 : f32 to vector<8x1xf32>
    %19 = arith.addf %17, %18 : vector<8x1xf32>
    %20 = math.rsqrt %19 : vector<8x1xf32>
    %21 = vector.broadcast %20 : vector<8x1xf32> to vector<8x128xf32>
    %22 = arith.mulf %4, %21 : vector<8x128xf32>
    %23 = arith.subf %6, %5 : vector<8x128xf32>
    %cst_14 = arith.constant dense<0.000000e+00> : vector<128xf32>
    %24 = vector.multi_reduction <add>, %23, %cst_14 [0] : vector<8x128xf32> to vector<128xf32>
    %25 = vector.shape_cast %24 : vector<128xf32> to vector<1x128xf32>
    %cst_15 = arith.constant 1.250000e-01 : f32
    %26 = vector.broadcast %cst_15 : f32 to vector<1x128xf32>
    %27 = arith.mulf %25, %26 : vector<1x128xf32>
    %28 = arith.mulf %27, %27 : vector<1x128xf32>
    %cst_16 = arith.constant dense<0.000000e+00> : vector<1xf32>
    %29 = vector.multi_reduction <add>, %28, %cst_16 [1] : vector<1x128xf32> to vector<1xf32>
    %30 = vector.shape_cast %29 : vector<1xf32> to vector<1x1xf32>
    %cst_17 = arith.constant 1.000000e-30 : f32
    %31 = vector.broadcast %cst_17 : f32 to vector<1x1xf32>
    %32 = arith.addf %30, %31 : vector<1x1xf32>
    %33 = math.rsqrt %32 : vector<1x1xf32>
    %34 = vector.broadcast %33 : vector<1x1xf32> to vector<1x128xf32>
    %35 = arith.mulf %27, %34 : vector<1x128xf32>
    %36 = arith.subf %22, %14 : vector<8x128xf32>
    %37 = arith.mulf %36, %36 : vector<8x128xf32>
    %cst_18 = arith.constant dense<0.000000e+00> : vector<8xf32>
    %38 = vector.multi_reduction <add>, %37, %cst_18 [1] : vector<8x128xf32> to vector<8xf32>
    %39 = vector.shape_cast %38 : vector<8xf32> to vector<8x1xf32>
    %40 = math.sqrt %39 : vector<8x1xf32>
    %cst_19 = arith.constant 1.000000e-07 : f32
    %41 = vector.broadcast %cst_19 : f32 to vector<8x1xf32>
    %42 = arith.addf %40, %41 : vector<8x1xf32>
    %43 = tpu.reciprocal %42 {approx = true} : vector<8x1xf32> -> vector<8x1xf32>
    %44 = vector.broadcast %43 : vector<8x1xf32> to vector<8x128xf32>
    %45 = arith.mulf %36, %44 : vector<8x128xf32>
    %46 = arith.mulf %45, %45 : vector<8x128xf32>
    %cst_20 = arith.constant dense<0.000000e+00> : vector<8xf32>
    %47 = vector.multi_reduction <add>, %46, %cst_20 [1] : vector<8x128xf32> to vector<8xf32>
    %48 = vector.shape_cast %47 : vector<8xf32> to vector<8x1xf32>
    %49 = math.sqrt %48 : vector<8x1xf32>
    %50 = arith.mulf %35, %35 : vector<1x128xf32>
    %cst_21 = arith.constant dense<0.000000e+00> : vector<1xf32>
    %51 = vector.multi_reduction <add>, %50, %cst_21 [1] : vector<1x128xf32> to vector<1xf32>
    %52 = vector.shape_cast %51 : vector<1xf32> to vector<1x1xf32>
    %53 = math.sqrt %52 : vector<1x1xf32>
    %54 = vector.broadcast %53 : vector<1x1xf32> to vector<8x1xf32>
    %55 = arith.mulf %49, %54 : vector<8x1xf32>
    %cst_22 = arith.constant 9.99999993E-9 : f32
    %56 = vector.broadcast %cst_22 : f32 to vector<8x1xf32>
    %57 = arith.maximumf %55, %56 : vector<8x1xf32>
    %58 = vector.broadcast %35 : vector<1x128xf32> to vector<8x128xf32>
    %59 = arith.mulf %45, %58 : vector<8x128xf32>
    %cst_23 = arith.constant dense<0.000000e+00> : vector<8xf32>
    %60 = vector.multi_reduction <add>, %59, %cst_23 [1] : vector<8x128xf32> to vector<8xf32>
    %61 = vector.shape_cast %60 : vector<8xf32> to vector<8x1xf32>
    %62 = tpu.reciprocal %57 {approx = true} : vector<8x1xf32> -> vector<8x1xf32>
    %63 = arith.mulf %61, %62 : vector<8x1xf32>
    %64 = tpu.iota {dimensions = array<i32: 0>} : vector<8x1xi32>
    %c2_i32 = arith.constant 2 : i32
    %65 = vector.broadcast %c2_i32 : i32 to vector<8x1xi32>
    %66 = arith.cmpi slt, %64, %65 : vector<8x1xi32>
    %cst_24 = arith.constant 1.000000e+00 : f32
    %67 = vector.broadcast %cst_24 : f32 to vector<8x1xf32>
    %68 = arith.subf %67, %63 : vector<8x1xf32>
    %cst_25 = arith.constant 0.000000e+00 : f32
    %69 = vector.broadcast %cst_25 : f32 to vector<8x1xf32>
    %70 = arith.select %66, %68, %69 : vector<8x1xi1>, vector<8x1xf32>
    %71 = vector.shape_cast %70 : vector<8x1xf32> to vector<1x8x1xf32>
    %cst_26 = arith.constant dense<0.000000e+00> : vector<1xf32>
    %72 = vector.multi_reduction <add>, %71, %cst_26 [1, 2] : vector<1x8x1xf32> to vector<1xf32>
    %73 = vector.shape_cast %72 : vector<1xf32> to vector<1x1x1xf32>
    %74 = vector.extract %73[0, 0, 0] : f32 from vector<1x1x1xf32>
    %cst_27 = arith.constant 5.000000e-01 : f32
    %75 = arith.mulf %74, %cst_27 : f32
    %c0_28 = arith.constant 0 : index
    %c0_29 = arith.constant 0 : index
    %76 = memref.load %arg6[%c0_28, %c0_29] : memref<1x1xf32, #tpu.memory_space<smem>>
    memref.store %75, %arg6[%c0_28, %c0_29] : memref<1x1xf32, #tpu.memory_space<smem>>
    return
  }
  func.func @transform_0(%arg0: i32) -> (i32, i32) {
    %c0_i32 = arith.constant 0 : i32
    %c0_i32_0 = arith.constant 0 : i32
    return %c0_i32, %arg0 : i32, i32
  }
  func.func @transform_1(%arg0: i32) -> (i32, i32) {
    %c0_i32 = arith.constant 0 : i32
    %c0_i32_0 = arith.constant 0 : i32
    return %c0_i32, %arg0 : i32, i32
  }
  func.func @transform_2(%arg0: i32) -> (i32, i32) {
    %c0_i32 = arith.constant 0 : i32
    %c0_i32_0 = arith.constant 0 : i32
    return %arg0, %c0_i32 : i32, i32
  }
  func.func @transform_3(%arg0: i32) -> (i32, i32) {
    %c0_i32 = arith.constant 0 : i32
    %c0_i32_0 = arith.constant 0 : i32
    %c0_i32_1 = arith.constant 0 : i32
    return %c0_i32, %c0_i32_0 : i32, i32
  }
  func.func @transform_4(%arg0: i32) -> (i32, i32) {
    %c0_i32 = arith.constant 0 : i32
    %c0_i32_0 = arith.constant 0 : i32
    %c0_i32_1 = arith.constant 0 : i32
    return %c0_i32, %c0_i32_0 : i32, i32
  }
  func.func @transform_5(%arg0: i32) -> (i32, i32) {
    %c0_i32 = arith.constant 0 : i32
    %c0_i32_0 = arith.constant 0 : i32
    %c0_i32_1 = arith.constant 0 : i32
    return %c0_i32, %c0_i32_0 : i32, i32
  }
}

</mosaic_0001>

<llo_original>
// kernel: _lambda_.1
$region0: #{_lambda_.1}
  #allocation0 [shape = 'u32[]', space=smem, size = 0x4, offset = 0x4, fixed_abs, tag = 'smem constant byte address 0x4 - core index']
  #allocation1 [shape = 'u32[144,128]{1,0:T(1,128)}', space=vmem, size = 0x12000, scoped, tag = 'internal scratch']
  %s0 = inlined_call_operand.vmem [shape: bf16[8,1792], index: 0, kind: input, shape index: {}]
  %s1 = inlined_call_operand.vmem [shape: bf16[8,1792], index: 1, kind: input, shape index: {}]
  %s2 = inlined_call_operand.vmem [shape: bf16[1792,128], index: 2, kind: input, shape index: {}]
  %s3 = inlined_call_operand.vmem [shape: f32[8,128], index: 3, kind: input, shape index: {}]
  %s4 = inlined_call_operand.vmem [shape: f32[8,128], index: 4, kind: input, shape index: {}]
  %s5 = inlined_call_operand.hbm [shape: f32[1,1], index: 5, kind: output, shape index: {}]
  %s6 = sld [smem:[#allocation0]]
  $region30: #{_lambda_.1} parent=0
    _
  %s8 = ssub.s32 1, %s6
  %s9 = scalar_select 0, %s8, %s6
  $region1: #{_lambda_.1} parent=0
    #allocation2 [shape = 'u8[512]{0}', space=smem, size = 0x200, scoped, tag = 'output window, operand 0, single buffered']
    #allocation3 [shape = 's32[1]{0}', space=sflag, size = 0x4, scoped, tag = 'scoped memory for _lambda_.1']
    %10 = vsyncpa [#allocation3], 0
    // Predicated region
    $region2: #{_lambda_.1} parent=1 // pred_check
      _
    $region3: #{_lambda_.1} parent=1 // pred_check_branch
      %12 = sbr.rel (0) target = $region5
    $region4: #{_lambda_.1} parent=1 // pred_region
      _
    $region5: #{_lambda_.1} parent=1 // pred_fallthru
      _
    // Predicated region
    $region6: #{_lambda_.1} parent=1 // pred_check
      _
    $region7: #{_lambda_.1} parent=1 // pred_check_branch
      %14 = sbr.rel (0) target = $region9
    $region8: #{_lambda_.1} parent=1 // pred_region
      _
    $region9: #{_lambda_.1} parent=1 // pred_fallthru
      _
    // Predicated region
    $region10: #{_lambda_.1} parent=1 // pred_check
      _
    $region11: #{_lambda_.1} parent=1 // pred_check_branch
      %16 = sbr.rel (0) target = $region13
    $region12: #{_lambda_.1} parent=1 // pred_region
      _
    $region13: #{_lambda_.1} parent=1 // pred_fallthru
      _
    // Predicated region
    $region14: #{_lambda_.1} parent=1 // pred_check
      _
    $region15: #{_lambda_.1} parent=1 // pred_check_branch
      %18 = sbr.rel (0) target = $region17
    $region16: #{_lambda_.1} parent=1 // pred_region
      _
    $region17: #{_lambda_.1} parent=1 // pred_fallthru
      _
    // Predicated region
    $region18: #{_lambda_.1} parent=1 // pred_check
      _
    $region19: #{_lambda_.1} parent=1 // pred_check_branch
      %20 = sbr.rel (0) target = $region21
    $region20: #{_lambda_.1} parent=1 // pred_region
      _
    $region21: #{_lambda_.1} parent=1 // pred_fallthru
      _
    %v22 = vld [vmem:[%s2] sm:$0xf]
    %v23 = vld [vmem:[%s2 + $0x4] sm:$0xf]
    %v24 = vld [vmem:[%s2 + $0x8] sm:$0xf]
    %v25 = vld [vmem:[%s2 + $0xc] sm:$0xf]
    %v26 = vld [vmem:[%s2 + $0x10] sm:$0xf]
    %v27 = vld [vmem:[%s2 + $0x14] sm:$0xf]
    %v28 = vld [vmem:[%s2 + $0x18] sm:$0xf]
    %v29 = vld [vmem:[%s2 + $0x1c] sm:$0xf]
    %v30 = vld [vmem:[%s2 + $0x20] sm:$0xf]
    %v31 = vld [vmem:[%s2 + $0x24] sm:$0xf]
    %v32 = vld [vmem:[%s2 + $0x28] sm:$0xf]
    %v33 = vld [vmem:[%s2 + $0x2c] sm:$0xf]
    %v34 = vld [vmem:[%s2 + $0x30] sm:$0xf]
    %v35 = vld [vmem:[%s2 + $0x34] sm:$0xf]
    %v36 = vld [vmem:[%s2 + $0x38] sm:$0xf]
    %v37 = vld [vmem:[%s2 + $0x3c] sm:$0xf]
    %v38 = vld [vmem:[%s2 + $0x40] sm:$0xf]
    %v39 = vld [vmem:[%s2 + $0x44] sm:$0xf]
    %v40 = vld [vmem:[%s2 + $0x48] sm:$0xf]
    %v41 = vld [vmem:[%s2 + $0x4c] sm:$0xf]
    %v42 = vld [vmem:[%s2 + $0x50] sm:$0xf]
    %v43 = vld [vmem:[%s2 + $0x54] sm:$0xf]
    %v44 = vld [vmem:[%s2 + $0x58] sm:$0xf]
    %v45 = vld [vmem:[%s2 + $0x5c] sm:$0xf]
    %v46 = vld [vmem:[%s2 + $0x60] sm:$0xf]
    %v47 = vld [vmem:[%s2 + $0x64] sm:$0xf]
    %v48 = vld [vmem:[%s2 + $0x68] sm:$0xf]
    %v49 = vld [vmem:[%s2 + $0x6c] sm:$0xf]
    %v50 = vld [vmem:[%s2 + $0x70] sm:$0xf]
    %v51 = vld [vmem:[%s2 + $0x74] sm:$0xf]
    %v52 = vld [vmem:[%s2 + $0x78] sm:$0xf]
    %v53 = vld [vmem:[%s2 + $0x7c] sm:$0xf]
    %v54 = vld [vmem:[%s2 + $0x80] sm:$0xf]
    %v55 = vld [vmem:[%s2 + $0x84] sm:$0xf]
    %v56 = vld [vmem:[%s2 + $0x88] sm:$0xf]
    %v57 = vld [vmem:[%s2 + $0x8c] sm:$0xf]
    %v58 = vld [vmem:[%s2 + $0x90] sm:$0xf]
    %v59 = vld [vmem:[%s2 + $0x94] sm:$0xf]
    %v60 = vld [vmem:[%s2 + $0x98] sm:$0xf]
    %v61 = vld [vmem:[%s2 + $0x9c] sm:$0xf]
    %v62 = vld [vmem:[%s2 + $0xa0] sm:$0xf]
    %v63 = vld [vmem:[%s2 + $0xa4] sm:$0xf]
    %v64 = vld [vmem:[%s2 + $0xa8] sm:$0xf]
    %v65 = vld [vmem:[%s2 + $0xac] sm:$0xf]
    %v66 = vld [vmem:[%s2 + $0xb0] sm:$0xf]
    %v67 = vld [vmem:[%s2 + $0xb4] sm:$0xf]
    %v68 = vld [vmem:[%s2 + $0xb8] sm:$0xf]
    %v69 = vld [vmem:[%s2 + $0xbc] sm:$0xf]
    %v70 = vld [vmem:[%s2 + $0xc0] sm:$0xf]
    %v71 = vld [vmem:[%s2 + $0xc4] sm:$0xf]
    %v72 = vld [vmem:[%s2 + $0xc8] sm:$0xf]
    %v73 = vld [vmem:[%s2 + $0xcc] sm:$0xf]
    %v74 = vld [vmem:[%s2 + $0xd0] sm:$0xf]
    %v75 = vld [vmem:[%s2 + $0xd4] sm:$0xf]
    %v76 = vld [vmem:[%s2 + $0xd8] sm:$0xf]
    %v77 = vld [vmem:[%s2 + $0xdc] sm:$0xf]
    %v78 = vld [vmem:[%s2 + $0xe0] sm:$0xf]
    %v79 = vld [vmem:[%s2 + $0xe4] sm:$0xf]
    %v80 = vld [vmem:[%s2 + $0xe8] sm:$0xf]
    %v81 = vld [vmem:[%s2 + $0xec] sm:$0xf]
    %v82 = vld [vmem:[%s2 + $0xf0] sm:$0xf]
    %v83 = vld [vmem:[%s2 + $0xf4] sm:$0xf]
    %v84 = vld [vmem:[%s2 + $0xf8] sm:$0xf]
    %v85 = vld [vmem:[%s2 + $0xfc] sm:$0xf]
    %v86 = vld [vmem:[%s2 + $0x100] sm:$0xf]
    %v87 = vld [vmem:[%s2 + $0x104] sm:$0xf]
    %v88 = vld [vmem:[%s2 + $0x108] sm:$0xf]
    %v89 = vld [vmem:[%s2 + $0x10c] sm:$0xf]
    %v90 = vld [vmem:[%s2 + $0x110] sm:$0xf]
    %v91 = vld [vmem:[%s2 + $0x114] sm:$0xf]
    %v92 = vld [vmem:[%s2 + $0x118] sm:$0xf]
    %v93 = vld [vmem:[%s2 + $0x11c] sm:$0xf]
    %v94 = vld [vmem:[%s2 + $0x120] sm:$0xf]
    %v95 = vld [vmem:[%s2 + $0x124] sm:$0xf]
    %v96 = vld [vmem:[%s2 + $0x128] sm:$0xf]
    %v97 = vld [vmem:[%s2 + $0x12c] sm:$0xf]
    %v98 = vld [vmem:[%s2 + $0x130] sm:$0xf]
    %v99 = vld [vmem:[%s2 + $0x134] sm:$0xf]
    %v100 = vld [vmem:[%s2 + $0x138] sm:$0xf]
    %v101 = vld [vmem:[%s2 + $0x13c] sm:$0xf]
    %v102 = vld [vmem:[%s2 + $0x140] sm:$0xf]
    %v103 = vld [vmem:[%s2 + $0x144] sm:$0xf]
    %v104 = vld [vmem:[%s2 + $0x148] sm:$0xf]
    %v105 = vld [vmem:[%s2 + $0x14c] sm:$0xf]
    %v106 = vld [vmem:[%s2 + $0x150] sm:$0xf]
    %v107 = vld [vmem:[%s2 + $0x154] sm:$0xf]
    %v108 = vld [vmem:[%s2 + $0x158] sm:$0xf]
    %v109 = vld [vmem:[%s2 + $0x15c] sm:$0xf]
    %v110 = vld [vmem:[%s2 + $0x160] sm:$0xf]
    %v111 = vld [vmem:[%s2 + $0x164] sm:$0xf]
    %v112 = vld [vmem:[%s2 + $0x168] sm:$0xf]
    %v113 = vld [vmem:[%s2 + $0x16c] sm:$0xf]
    %v114 = vld [vmem:[%s2 + $0x170] sm:$0xf]
    %v115 = vld [vmem:[%s2 + $0x174] sm:$0xf]
    %v116 = vld [vmem:[%s2 + $0x178] sm:$0xf]
    %v117 = vld [vmem:[%s2 + $0x17c] sm:$0xf]
    %v118 = vld [vmem:[%s2 + $0x180] sm:$0xf]
    %v119 = vld [vmem:[%s2 + $0x184] sm:$0xf]
    %v120 = vld [vmem:[%s2 + $0x188] sm:$0xf]
    %v121 = vld [vmem:[%s2 + $0x18c] sm:$0xf]
    %v122 = vld [vmem:[%s2 + $0x190] sm:$0xf]
    %v123 = vld [vmem:[%s2 + $0x194] sm:$0xf]
    %v124 = vld [vmem:[%s2 + $0x198] sm:$0xf]
    %v125 = vld [vmem:[%s2 + $0x19c] sm:$0xf]
    %v126 = vld [vmem:[%s2 + $0x1a0] sm:$0xf]
    %v127 = vld [vmem:[%s2 + $0x1a4] sm:$0xf]
    %v128 = vld [vmem:[%s2 + $0x1a8] sm:$0xf]
    %v129 = vld [vmem:[%s2 + $0x1ac] sm:$0xf]
    %v130 = vld [vmem:[%s2 + $0x1b0] sm:$0xf]
    %v131 = vld [vmem:[%s2 + $0x1b4] sm:$0xf]
    %v132 = vld [vmem:[%s2 + $0x1b8] sm:$0xf]
    %v133 = vld [vmem:[%s2 + $0x1bc] sm:$0xf]
    %v134 = vld [vmem:[%s2 + $0x1c0] sm:$0xf]
    %v135 = vld [vmem:[%s2 + $0x1c4] sm:$0xf]
    %v136 = vld [vmem:[%s2 + $0x1c8] sm:$0xf]
    %v137 = vld [vmem:[%s2 + $0x1cc] sm:$0xf]
    %v138 = vld [vmem:[%s2 + $0x1d0] sm:$0xf]
    %v139 = vld [vmem:[%s2 + $0x1d4] sm:$0xf]
    %v140 = vld [vmem:[%s2 + $0x1d8] sm:$0xf]
    %v141 = vld [vmem:[%s2 + $0x1dc] sm:$0xf]
    %v142 = vld [vmem:[%s2 + $0x1e0] sm:$0xf]
    %v143 = vld [vmem:[%s2 + $0x1e4] sm:$0xf]
    %v144 = vld [vmem:[%s2 + $0x1e8] sm:$0xf]
    %v145 = vld [vmem:[%s2 + $0x1ec] sm:$0xf]
    %v146 = vld [vmem:[%s2 + $0x1f0] sm:$0xf]
    %v147 = vld [vmem:[%s2 + $0x1f4] sm:$0xf]
    %v148 = vld [vmem:[%s2 + $0x1f8] sm:$0xf]
    %v149 = vld [vmem:[%s2 + $0x1fc] sm:$0xf]
    %v150 = vld [vmem:[%s2 + $0x200] sm:$0xf]
    %v151 = vld [vmem:[%s2 + $0x204] sm:$0xf]
    %v152 = vld [vmem:[%s2 + $0x208] sm:$0xf]
    %v153 = vld [vmem:[%s2 + $0x20c] sm:$0xf]
    %v154 = vld [vmem:[%s2 + $0x210] sm:$0xf]
    %v155 = vld [vmem:[%s2 + $0x214] sm:$0xf]
    %v156 = vld [vmem:[%s2 + $0x218] sm:$0xf]
    %v157 = vld [vmem:[%s2 + $0x21c] sm:$0xf]
    %v158 = vld [vmem:[%s2 + $0x220] sm:$0xf]
    %v159 = vld [vmem:[%s2 + $0x224] sm:$0xf]
    %v160 = vld [vmem:[%s2 + $0x228] sm:$0xf]
    %v161 = vld [vmem:[%s2 + $0x22c] sm:$0xf]
    %v162 = vld [vmem:[%s2 + $0x230] sm:$0xf]
    %v163 = vld [vmem:[%s2 + $0x234] sm:$0xf]
    %v164 = vld [vmem:[%s2 + $0x238] sm:$0xf]
    %v165 = vld [vmem:[%s2 + $0x23c] sm:$0xf]
    %v166 = vld [vmem:[%s2 + $0x240] sm:$0xf]
    %v167 = vld [vmem:[%s2 + $0x244] sm:$0xf]
    %v168 = vld [vmem:[%s2 + $0x248] sm:$0xf]
    %v169 = vld [vmem:[%s2 + $0x24c] sm:$0xf]
    %v170 = vld [vmem:[%s2 + $0x250] sm:$0xf]
    %v171 = vld [vmem:[%s2 + $0x254] sm:$0xf]
    %v172 = vld [vmem:[%s2 + $0x258] sm:$0xf]
    %v173 = vld [vmem:[%s2 + $0x25c] sm:$0xf]
    %v174 = vld [vmem:[%s2 + $0x260] sm:$0xf]
    %v175 = vld [vmem:[%s2 + $0x264] sm:$0xf]
    %v176 = vld [vmem:[%s2 + $0x268] sm:$0xf]
    %v177 = vld [vmem:[%s2 + $0x26c] sm:$0xf]
    %v178 = vld [vmem:[%s2 + $0x270] sm:$0xf]
    %v179 = vld [vmem:[%s2 + $0x274] sm:$0xf]
    %v180 = vld [vmem:[%s2 + $0x278] sm:$0xf]
    %v181 = vld [vmem:[%s2 + $0x27c] sm:$0xf]
    %v182 = vld [vmem:[%s2 + $0x280] sm:$0xf]
    %v183 = vld [vmem:[%s2 + $0x284] sm:$0xf]
    %v184 = vld [vmem:[%s2 + $0x288] sm:$0xf]
    %v185 = vld [vmem:[%s2 + $0x28c] sm:$0xf]
    %v186 = vld [vmem:[%s2 + $0x290] sm:$0xf]
    %v187 = vld [vmem:[%s2 + $0x294] sm:$0xf]
    %v188 = vld [vmem:[%s2 + $0x298] sm:$0xf]
    %v189 = vld [vmem:[%s2 + $0x29c] sm:$0xf]
    %v190 = vld [vmem:[%s2 + $0x2a0] sm:$0xf]
    %v191 = vld [vmem:[%s2 + $0x2a4] sm:$0xf]
    %v192 = vld [vmem:[%s2 + $0x2a8] sm:$0xf]
    %v193 = vld [vmem:[%s2 + $0x2ac] sm:$0xf]
    %v194 = vld [vmem:[%s2 + $0x2b0] sm:$0xf]
    %v195 = vld [vmem:[%s2 + $0x2b4] sm:$0xf]
    %v196 = vld [vmem:[%s2 + $0x2b8] sm:$0xf]
    %v197 = vld [vmem:[%s2 + $0x2bc] sm:$0xf]
    %v198 = vld [vmem:[%s2 + $0x2c0] sm:$0xf]
    %v199 = vld [vmem:[%s2 + $0x2c4] sm:$0xf]
    %v200 = vld [vmem:[%s2 + $0x2c8] sm:$0xf]
    %v201 = vld [vmem:[%s2 + $0x2cc] sm:$0xf]
    %v202 = vld [vmem:[%s2 + $0x2d0] sm:$0xf]
    %v203 = vld [vmem:[%s2 + $0x2d4] sm:$0xf]
    %v204 = vld [vmem:[%s2 + $0x2d8] sm:$0xf]
    %v205 = vld [vmem:[%s2 + $0x2dc] sm:$0xf]
    %v206 = vld [vmem:[%s2 + $0x2e0] sm:$0xf]
    %v207 = vld [vmem:[%s2 + $0x2e4] sm:$0xf]
    %v208 = vld [vmem:[%s2 + $0x2e8] sm:$0xf]
    %v209 = vld [vmem:[%s2 + $0x2ec] sm:$0xf]
    %v210 = vld [vmem:[%s2 + $0x2f0] sm:$0xf]
    %v211 = vld [vmem:[%s2 + $0x2f4] sm:$0xf]
    %v212 = vld [vmem:[%s2 + $0x2f8] sm:$0xf]
    %v213 = vld [vmem:[%s2 + $0x2fc] sm:$0xf]
    %v214 = vld [vmem:[%s2 + $0x300] sm:$0xf]
    %v215 = vld [vmem:[%s2 + $0x304] sm:$0xf]
    %v216 = vld [vmem:[%s2 + $0x308] sm:$0xf]
    %v217 = vld [vmem:[%s2 + $0x30c] sm:$0xf]
    %v218 = vld [vmem:[%s2 + $0x310] sm:$0xf]
    %v219 = vld [vmem:[%s2 + $0x314] sm:$0xf]
    %v220 = vld [vmem:[%s2 + $0x318] sm:$0xf]
    %v221 = vld [vmem:[%s2 + $0x31c] sm:$0xf]
    %v222 = vld [vmem:[%s2 + $0x320] sm:$0xf]
    %v223 = vld [vmem:[%s2 + $0x324] sm:$0xf]
    %v224 = vld [vmem:[%s2 + $0x328] sm:$0xf]
    %v225 = vld [vmem:[%s2 + $0x32c] sm:$0xf]
    %v226 = vld [vmem:[%s2 + $0x330] sm:$0xf]
    %v227 = vld [vmem:[%s2 + $0x334] sm:$0xf]
    %v228 = vld [vmem:[%s2 + $0x338] sm:$0xf]
    %v229 = vld [vmem:[%s2 + $0x33c] sm:$0xf]
    %v230 = vld [vmem:[%s2 + $0x340] sm:$0xf]
    %v231 = vld [vmem:[%s2 + $0x344] sm:$0xf]
    %v232 = vld [vmem:[%s2 + $0x348] sm:$0xf]
    %v233 = vld [vmem:[%s2 + $0x34c] sm:$0xf]
    %v234 = vld [vmem:[%s2 + $0x350] sm:$0xf]
    %v235 = vld [vmem:[%s2 + $0x354] sm:$0xf]
    %v236 = vld [vmem:[%s2 + $0x358] sm:$0xf]
    %v237 = vld [vmem:[%s2 + $0x35c] sm:$0xf]
    %v238 = vld [vmem:[%s2 + $0x360] sm:$0xf]
    %v239 = vld [vmem:[%s2 + $0x364] sm:$0xf]
    %v240 = vld [vmem:[%s2 + $0x368] sm:$0xf]
    %v241 = vld [vmem:[%s2 + $0x36c] sm:$0xf]
    %v242 = vld [vmem:[%s2 + $0x370] sm:$0xf]
    %v243 = vld [vmem:[%s2 + $0x374] sm:$0xf]
    %v244 = vld [vmem:[%s2 + $0x378] sm:$0xf]
    %v245 = vld [vmem:[%s2 + $0x37c] sm:$0xf]
    %v246 = vld [vmem:[%s0] sm:$0xff]
    %v247 = vld [vmem:[%s0 + $0x8] sm:$0xff]
    %v248 = vld [vmem:[%s0 + $0x10] sm:$0xff]
    %v249 = vld [vmem:[%s0 + $0x18] sm:$0xff]
    %v250 = vld [vmem:[%s0 + $0x20] sm:$0xff]
    %v251 = vld [vmem:[%s0 + $0x28] sm:$0xff]
    %v252 = vld [vmem:[%s0 + $0x30] sm:$0xff]
    %v260 = vunpack.c.l.b16 %v246
    %v261 = vunpack.c.h.b16 %v246
    %v262 = vunpack.c.l.b16 %v247
    %v263 = vunpack.c.h.b16 %v247
    %v264 = vunpack.c.l.b16 %v248
    %v265 = vunpack.c.h.b16 %v248
    %v266 = vunpack.c.l.b16 %v249
    %v267 = vunpack.c.h.b16 %v249
    %v268 = vunpack.c.l.b16 %v250
    %v269 = vunpack.c.h.b16 %v250
    %v270 = vunpack.c.l.b16 %v251
    %v271 = vunpack.c.h.b16 %v251
    %v272 = vunpack.c.l.b16 %v252
    %v273 = vunpack.c.h.b16 %v252
    %v274 = vpack.c.b16 %v260, %v260
    %v275 = vpack.c.b16 %v261, %v261
    %v276 = vpack.c.b16 %v262, %v262
    %v277 = vpack.c.b16 %v263, %v263
    %v278 = vpack.c.b16 %v264, %v264
    %v279 = vpack.c.b16 %v265, %v265
    %v280 = vpack.c.b16 %v266, %v266
    %v281 = vpack.c.b16 %v267, %v267
    %v282 = vpack.c.b16 %v268, %v268
    %v283 = vpack.c.b16 %v269, %v269
    %v284 = vpack.c.b16 %v270, %v270
    %v285 = vpack.c.b16 %v271, %v271
    %v286 = vpack.c.b16 %v272, %v272
    %v287 = vpack.c.b16 %v273, %v273
    %v526 = vunpack.c.l.b16 %v22
    %v527 = vunpack.c.l.b16 %v23
    %v528 = vunpack.c.l.b16 %v24
    %v529 = vunpack.c.l.b16 %v25
    %v530 = vunpack.c.l.b16 %v26
    %v531 = vunpack.c.l.b16 %v27
    %v532 = vunpack.c.l.b16 %v28
    %v533 = vunpack.c.l.b16 %v29
    %v534 = vunpack.c.l.b16 %v30
    %v535 = vunpack.c.l.b16 %v31
    %v536 = vunpack.c.l.b16 %v32
    %v537 = vunpack.c.l.b16 %v33
    %v538 = vunpack.c.l.b16 %v34
    %v539 = vunpack.c.l.b16 %v35
    %v540 = vunpack.c.l.b16 %v36
    %v541 = vunpack.c.l.b16 %v37
    %v542 = vunpack.c.l.b16 %v38
    %v543 = vunpack.c.l.b16 %v39
    %v544 = vunpack.c.l.b16 %v40
    %v545 = vunpack.c.l.b16 %v41
    %v546 = vunpack.c.l.b16 %v42
    %v547 = vunpack.c.l.b16 %v43
    %v548 = vunpack.c.l.b16 %v44
    %v549 = vunpack.c.l.b16 %v45
    %v550 = vunpack.c.l.b16 %v46
    %v551 = vunpack.c.l.b16 %v47
    %v552 = vunpack.c.l.b16 %v48
    %v553 = vunpack.c.l.b16 %v49
    %v554 = vunpack.c.l.b16 %v50
    %v555 = vunpack.c.l.b16 %v51
    %v556 = vunpack.c.l.b16 %v52
    %v557 = vunpack.c.l.b16 %v53
    %v558 = vunpack.c.l.b16 %v54
    %v559 = vunpack.c.l.b16 %v55
    %v560 = vunpack.c.l.b16 %v56
    %v561 = vunpack.c.l.b16 %v57
    %v562 = vunpack.c.l.b16 %v58
    %v563 = vunpack.c.l.b16 %v59
    %v564 = vunpack.c.l.b16 %v60
    %v565 = vunpack.c.l.b16 %v61
    %v566 = vunpack.c.l.b16 %v62
    %v567 = vunpack.c.l.b16 %v63
    %v568 = vunpack.c.l.b16 %v64
    %v569 = vunpack.c.l.b16 %v65
    %v570 = vunpack.c.l.b16 %v66
    %v571 = vunpack.c.l.b16 %v67
    %v572 = vunpack.c.l.b16 %v68
    %v573 = vunpack.c.l.b16 %v69
    %v574 = vunpack.c.l.b16 %v70
    %v575 = vunpack.c.l.b16 %v71
    %v576 = vunpack.c.l.b16 %v72
    %v577 = vunpack.c.l.b16 %v73
    %v578 = vunpack.c.l.b16 %v74
    %v579 = vunpack.c.l.b16 %v75
    %v580 = vunpack.c.l.b16 %v76
    %v581 = vunpack.c.l.b16 %v77
    %v582 = vunpack.c.l.b16 %v78
    %v583 = vunpack.c.l.b16 %v79
    %v584 = vunpack.c.l.b16 %v80
    %v585 = vunpack.c.l.b16 %v81
    %v586 = vunpack.c.l.b16 %v82
    %v587 = vunpack.c.l.b16 %v83
    %v588 = vunpack.c.l.b16 %v84
    %v589 = vunpack.c.l.b16 %v85
    %v590 = vunpack.c.l.b16 %v86
    %v591 = vunpack.c.l.b16 %v87
    %v592 = vunpack.c.l.b16 %v88
    %v593 = vunpack.c.l.b16 %v89
    %v594 = vunpack.c.l.b16 %v90
    %v595 = vunpack.c.l.b16 %v91
    %v596 = vunpack.c.l.b16 %v92
    %v597 = vunpack.c.l.b16 %v93
    %v598 = vunpack.c.l.b16 %v94
    %v599 = vunpack.c.l.b16 %v95
    %v600 = vunpack.c.l.b16 %v96
    %v601 = vunpack.c.l.b16 %v97
    %v602 = vunpack.c.l.b16 %v98
    %v603 = vunpack.c.l.b16 %v99
    %v604 = vunpack.c.l.b16 %v100
    %v605 = vunpack.c.l.b16 %v101
    %v606 = vunpack.c.l.b16 %v102
    %v607 = vunpack.c.l.b16 %v103
    %v608 = vunpack.c.l.b16 %v104
    %v609 = vunpack.c.l.b16 %v105
    %v610 = vunpack.c.l.b16 %v106
    %v611 = vunpack.c.l.b16 %v107
    %v612 = vunpack.c.l.b16 %v108
    %v613 = vunpack.c.l.b16 %v109
    %v614 = vunpack.c.l.b16 %v110
    %v615 = vunpack.c.l.b16 %v111
    %v616 = vunpack.c.l.b16 %v112
    %v617 = vunpack.c.l.b16 %v113
    %v618 = vunpack.c.l.b16 %v114
    %v619 = vunpack.c.l.b16 %v115
    %v620 = vunpack.c.l.b16 %v116
    %v621 = vunpack.c.l.b16 %v117
    %v622 = vunpack.c.l.b16 %v118
    %v623 = vunpack.c.l.b16 %v119
    %v624 = vunpack.c.l.b16 %v120
    %v625 = vunpack.c.l.b16 %v121
    %v626 = vunpack.c.l.b16 %v122
    %v627 = vunpack.c.l.b16 %v123
    %v628 = vunpack.c.l.b16 %v124
    %v629 = vunpack.c.l.b16 %v125
    %v630 = vunpack.c.l.b16 %v126
    %v631 = vunpack.c.l.b16 %v127
    %v632 = vunpack.c.l.b16 %v128
    %v633 = vunpack.c.l.b16 %v129
    %v634 = vunpack.c.l.b16 %v130
    %v635 = vunpack.c.l.b16 %v131
    %v636 = vunpack.c.l.b16 %v132
    %v637 = vunpack.c.l.b16 %v133
    %v638 = vunpack.c.l.b16 %v134
    %v639 = vunpack.c.l.b16 %v135
    %v640 = vunpack.c.l.b16 %v136
    %v641 = vunpack.c.l.b16 %v137
    %v642 = vunpack.c.l.b16 %v138
    %v643 = vunpack.c.l.b16 %v139
    %v644 = vunpack.c.l.b16 %v140
    %v645 = vunpack.c.l.b16 %v141
    %v646 = vunpack.c.l.b16 %v142
    %v647 = vunpack.c.l.b16 %v143
    %v648 = vunpack.c.l.b16 %v144
    %v649 = vunpack.c.l.b16 %v145
    %v650 = vunpack.c.l.b16 %v146
    %v651 = vunpack.c.l.b16 %v147
    %v652 = vunpack.c.l.b16 %v148
    %v653 = vunpack.c.l.b16 %v149
    %v654 = vunpack.c.l.b16 %v150
    %v655 = vunpack.c.l.b16 %v151
    %v656 = vunpack.c.l.b16 %v152
    %v657 = vunpack.c.l.b16 %v153
    %v658 = vunpack.c.l.b16 %v154
    %v659 = vunpack.c.l.b16 %v155
    %v660 = vunpack.c.l.b16 %v156
    %v661 = vunpack.c.l.b16 %v157
    %v662 = vunpack.c.l.b16 %v158
    %v663 = vunpack.c.l.b16 %v159
    %v664 = vunpack.c.l.b16 %v160
    %v665 = vunpack.c.l.b16 %v161
    %v666 = vunpack.c.l.b16 %v162
    %v667 = vunpack.c.l.b16 %v163
    %v668 = vunpack.c.l.b16 %v164
    %v669 = vunpack.c.l.b16 %v165
    %v670 = vunpack.c.l.b16 %v166
    %v671 = vunpack.c.l.b16 %v167
    %v672 = vunpack.c.l.b16 %v168
    %v673 = vunpack.c.l.b16 %v169
    %v674 = vunpack.c.l.b16 %v170
    %v675 = vunpack.c.l.b16 %v171
    %v676 = vunpack.c.l.b16 %v172
    %v677 = vunpack.c.l.b16 %v173
    %v678 = vunpack.c.l.b16 %v174
    %v679 = vunpack.c.l.b16 %v175
    %v680 = vunpack.c.l.b16 %v176
    %v681 = vunpack.c.l.b16 %v177
    %v682 = vunpack.c.l.b16 %v178
    %v683 = vunpack.c.l.b16 %v179
    %v684 = vunpack.c.l.b16 %v180
    %v685 = vunpack.c.l.b16 %v181
    %v686 = vunpack.c.l.b16 %v182
    %v687 = vunpack.c.l.b16 %v183
    %v688 = vunpack.c.l.b16 %v184
    %v689 = vunpack.c.l.b16 %v185
    %v690 = vunpack.c.l.b16 %v186
    %v691 = vunpack.c.l.b16 %v187
    %v692 = vunpack.c.l.b16 %v188
    %v693 = vunpack.c.l.b16 %v189
    %v694 = vunpack.c.l.b16 %v190
    %v695 = vunpack.c.l.b16 %v191
    %v696 = vunpack.c.l.b16 %v192
    %v697 = vunpack.c.l.b16 %v193
    %v698 = vunpack.c.l.b16 %v194
    %v699 = vunpack.c.l.b16 %v195
    %v700 = vunpack.c.l.b16 %v196
    %v701 = vunpack.c.l.b16 %v197
    %v702 = vunpack.c.l.b16 %v198
    %v703 = vunpack.c.l.b16 %v199
    %v704 = vunpack.c.l.b16 %v200
    %v705 = vunpack.c.l.b16 %v201
    %v706 = vunpack.c.l.b16 %v202
    %v707 = vunpack.c.l.b16 %v203
    %v708 = vunpack.c.l.b16 %v204
    %v709 = vunpack.c.l.b16 %v205
    %v710 = vunpack.c.l.b16 %v206
    %v711 = vunpack.c.l.b16 %v207
    %v712 = vunpack.c.l.b16 %v208
    %v713 = vunpack.c.l.b16 %v209
    %v714 = vunpack.c.l.b16 %v210
    %v715 = vunpack.c.l.b16 %v211
    %v716 = vunpack.c.l.b16 %v212
    %v717 = vunpack.c.l.b16 %v213
    %v718 = vunpack.c.l.b16 %v214
    %v719 = vunpack.c.l.b16 %v215
    %v720 = vunpack.c.l.b16 %v216
    %v721 = vunpack.c.l.b16 %v217
    %v722 = vunpack.c.l.b16 %v218
    %v723 = vunpack.c.l.b16 %v219
    %v724 = vunpack.c.l.b16 %v220
    %v725 = vunpack.c.l.b16 %v221
    %v726 = vunpack.c.l.b16 %v222
    %v727 = vunpack.c.l.b16 %v223
    %v728 = vunpack.c.l.b16 %v224
    %v729 = vunpack.c.l.b16 %v225
    %v730 = vunpack.c.l.b16 %v226
    %v731 = vunpack.c.l.b16 %v227
    %v732 = vunpack.c.l.b16 %v228
    %v733 = vunpack.c.l.b16 %v229
    %v734 = vunpack.c.l.b16 %v230
    %v735 = vunpack.c.l.b16 %v231
    %v736 = vunpack.c.l.b16 %v232
    %v737 = vunpack.c.l.b16 %v233
    %v738 = vunpack.c.l.b16 %v234
    %v739 = vunpack.c.l.b16 %v235
    %v740 = vunpack.c.l.b16 %v236
    %v741 = vunpack.c.l.b16 %v237
    %v742 = vunpack.c.l.b16 %v238
    %v743 = vunpack.c.l.b16 %v239
    %v744 = vunpack.c.l.b16 %v240
    %v745 = vunpack.c.l.b16 %v241
    %v746 = vunpack.c.l.b16 %v242
    %v747 = vunpack.c.l.b16 %v243
    %v748 = vunpack.c.l.b16 %v244
    %v749 = vunpack.c.l.b16 %v245
    %v750 = vpack.c.b16 %v527, %v526
    %v751 = vpack.c.b16 %v529, %v528
    %v752 = vpack.c.b16 %v531, %v530
    %v753 = vpack.c.b16 %v533, %v532
    %v754 = vpack.c.b16 %v535, %v534
    %v755 = vpack.c.b16 %v537, %v536
    %v756 = vpack.c.b16 %v539, %v538
    %v757 = vpack.c.b16 %v541, %v540
    %v758 = vpack.c.b16 %v543, %v542
    %v759 = vpack.c.b16 %v545, %v544
    %v760 = vpack.c.b16 %v547, %v546
    %v761 = vpack.c.b16 %v549, %v548
    %v762 = vpack.c.b16 %v551, %v550
    %v763 = vpack.c.b16 %v553, %v552
    %v764 = vpack.c.b16 %v555, %v554
    %v765 = vpack.c.b16 %v557, %v556
    %v766 = vpack.c.b16 %v559, %v558
    %v767 = vpack.c.b16 %v561, %v560
    %v768 = vpack.c.b16 %v563, %v562
    %v769 = vpack.c.b16 %v565, %v564
    %v770 = vpack.c.b16 %v567, %v566
    %v771 = vpack.c.b16 %v569, %v568
    %v772 = vpack.c.b16 %v571, %v570
    %v773 = vpack.c.b16 %v573, %v572
    %v774 = vpack.c.b16 %v575, %v574
    %v775 = vpack.c.b16 %v577, %v576
    %v776 = vpack.c.b16 %v579, %v578
    %v777 = vpack.c.b16 %v581, %v580
    %v778 = vpack.c.b16 %v583, %v582
    %v779 = vpack.c.b16 %v585, %v584
    %v780 = vpack.c.b16 %v587, %v586
    %v781 = vpack.c.b16 %v589, %v588
    %v782 = vpack.c.b16 %v591, %v590
    %v783 = vpack.c.b16 %v593, %v592
    %v784 = vpack.c.b16 %v595, %v594
    %v785 = vpack.c.b16 %v597, %v596
    %v786 = vpack.c.b16 %v599, %v598
    %v787 = vpack.c.b16 %v601, %v600
    %v788 = vpack.c.b16 %v603, %v602
    %v789 = vpack.c.b16 %v605, %v604
    %v790 = vpack.c.b16 %v607, %v606
    %v791 = vpack.c.b16 %v609, %v608
    %v792 = vpack.c.b16 %v611, %v610
    %v793 = vpack.c.b16 %v613, %v612
    %v794 = vpack.c.b16 %v615, %v614
    %v795 = vpack.c.b16 %v617, %v616
    %v796 = vpack.c.b16 %v619, %v618
    %v797 = vpack.c.b16 %v621, %v620
    %v798 = vpack.c.b16 %v623, %v622
    %v799 = vpack.c.b16 %v625, %v624
    %v800 = vpack.c.b16 %v627, %v626
    %v801 = vpack.c.b16 %v629, %v628
    %v802 = vpack.c.b16 %v631, %v630
    %v803 = vpack.c.b16 %v633, %v632
    %v804 = vpack.c.b16 %v635, %v634
    %v805 = vpack.c.b16 %v637, %v636
    %v806 = vpack.c.b16 %v639, %v638
    %v807 = vpack.c.b16 %v641, %v640
    %v808 = vpack.c.b16 %v643, %v642
    %v809 = vpack.c.b16 %v645, %v644
    %v810 = vpack.c.b16 %v647, %v646
    %v811 = vpack.c.b16 %v649, %v648
    %v812 = vpack.c.b16 %v651, %v650
    %v813 = vpack.c.b16 %v653, %v652
    %v814 = vpack.c.b16 %v655, %v654
    %v815 = vpack.c.b16 %v657, %v656
    %v816 = vpack.c.b16 %v659, %v658
    %v817 = vpack.c.b16 %v661, %v660
    %v818 = vpack.c.b16 %v663, %v662
    %v819 = vpack.c.b16 %v665, %v664
    %v820 = vpack.c.b16 %v667, %v666
    %v821 = vpack.c.b16 %v669, %v668
    %v822 = vpack.c.b16 %v671, %v670
    %v823 = vpack.c.b16 %v673, %v672
    %v824 = vpack.c.b16 %v675, %v674
    %v825 = vpack.c.b16 %v677, %v676
    %v826 = vpack.c.b16 %v679, %v678
    %v827 = vpack.c.b16 %v681, %v680
    %v828 = vpack.c.b16 %v683, %v682
    %v829 = vpack.c.b16 %v685, %v684
    %v830 = vpack.c.b16 %v687, %v686
    %v831 = vpack.c.b16 %v689, %v688
    %v832 = vpack.c.b16 %v691, %v690
    %v833 = vpack.c.b16 %v693, %v692
    %v834 = vpack.c.b16 %v695, %v694
    %v835 = vpack.c.b16 %v697, %v696
    %v836 = vpack.c.b16 %v699, %v698
    %v837 = vpack.c.b16 %v701, %v700
    %v838 = vpack.c.b16 %v703, %v702
    %v839 = vpack.c.b16 %v705, %v704
    %v840 = vpack.c.b16 %v707, %v706
    %v841 = vpack.c.b16 %v709, %v708
    %v842 = vpack.c.b16 %v711, %v710
    %v843 = vpack.c.b16 %v713, %v712
    %v844 = vpack.c.b16 %v715, %v714
    %v845 = vpack.c.b16 %v717, %v716
    %v846 = vpack.c.b16 %v719, %v718
    %v847 = vpack.c.b16 %v721, %v720
    %v848 = vpack.c.b16 %v723, %v722
    %v849 = vpack.c.b16 %v725, %v724
    %v850 = vpack.c.b16 %v727, %v726
    %v851 = vpack.c.b16 %v729, %v728
    %v852 = vpack.c.b16 %v731, %v730
    %v853 = vpack.c.b16 %v733, %v732
    %v854 = vpack.c.b16 %v735, %v734
    %v855 = vpack.c.b16 %v737, %v736
    %v856 = vpack.c.b16 %v739, %v738
    %v857 = vpack.c.b16 %v741, %v740
    %v858 = vpack.c.b16 %v743, %v742
    %v859 = vpack.c.b16 %v745, %v744
    %v860 = vpack.c.b16 %v747, %v746
    %v861 = vpack.c.b16 %v749, %v748
    %974 = vmatprep.subr.bf16.mxu0 0
    %975 = vmatpush1.bf16.msra.mxu0 %v750
    %976 = vmatprep.subr.bf16.mxu0 0
    %977 = vmatpush1.bf16.msra.mxu0 %v751
    %978 = vmatprep.subr.bf16.mxu0 0
    %979 = vmatpush1.bf16.msra.mxu0 %v752
    %980 = vmatprep.subr.bf16.mxu0 0
    %981 = vmatpush1.bf16.msra.mxu0 %v753
    %982 = vmatprep.subr.bf16.mxu0 0
    %983 = vmatpush1.bf16.msra.mxu0 %v754
    %984 = vmatprep.subr.bf16.mxu0 0
    %985 = vmatpush1.bf16.msra.mxu0 %v755
    %986 = vmatprep.subr.bf16.mxu0 0
    %987 = vmatpush1.bf16.msra.mxu0 %v756
    %988 = vmatprep.subr.bf16.mxu0 0
    %989 = vmatpush1.bf16.msra.mxu0 %v757
    %990 = vmatprep.subr.bf16.mxu0 0
    %991 = vmatpush1.bf16.msra.mxu0 %v758
    %992 = vmatprep.subr.bf16.mxu0 0
    %993 = vmatpush1.bf16.msra.mxu0 %v759
    %994 = vmatprep.subr.bf16.mxu0 0
    %995 = vmatpush1.bf16.msra.mxu0 %v760
    %996 = vmatprep.subr.bf16.mxu0 0
    %997 = vmatpush1.bf16.msra.mxu0 %v761
    %998 = vmatprep.subr.bf16.mxu0 0
    %999 = vmatpush1.bf16.msra.mxu0 %v762
    %1000 = vmatprep.subr.bf16.mxu0 0
    %1001 = vmatpush1.bf16.msra.mxu0 %v763
    %1002 = vmatprep.subr.bf16.mxu0 0
    %1003 = vmatpush1.bf16.msra.mxu0 %v764
    %1004 = vmatprep.subr.bf16.mxu0 0
    %1005 = vmatpush1.bf16.msra.mxu0 %v765
    %1006 = vmatprep.mubr.bf16.mxu0 %v275
    %1007 = vmatmul.mubr.bf16.gmra.mrb[0].mxu0 %v274
    %v1008 = vpop.f32.mrb[0].mxu0
    %v1009 = vadd.f32 0.0, %v1008
    %v1010 = vpop.f32.mrb[0].mxu0
    %v1011 = vpop.f32.mrb[0].mxu0
    %v1012 = vpop.f32.mrb[0].mxu0
    %1013 = vdwg.mxu0
    %1014 = vmatprep.subr.bf16.mxu0 0
    %1015 = vmatpush1.bf16.msra.mxu0 %v766
    %1016 = vmatprep.subr.bf16.mxu0 0
    %1017 = vmatpush1.bf16.msra.mxu0 %v767
    %1018 = vmatprep.subr.bf16.mxu0 0
    %1019 = vmatpush1.bf16.msra.mxu0 %v768
    %1020 = vmatprep.subr.bf16.mxu0 0
    %1021 = vmatpush1.bf16.msra.mxu0 %v769
    %1022 = vmatprep.subr.bf16.mxu0 0
    %1023 = vmatpush1.bf16.msra.mxu0 %v770
    %1024 = vmatprep.subr.bf16.mxu0 0
    %1025 = vmatpush1.bf16.msra.mxu0 %v771
    %1026 = vmatprep.subr.bf16.mxu0 0
    %1027 = vmatpush1.bf16.msra.mxu0 %v772
    %1028 = vmatprep.subr.bf16.mxu0 0
    %1029 = vmatpush1.bf16.msra.mxu0 %v773
    %1030 = vmatprep.subr.bf16.mxu0 0
    %1031 = vmatpush1.bf16.msra.mxu0 %v774
    %1032 = vmatprep.subr.bf16.mxu0 0
    %1033 = vmatpush1.bf16.msra.mxu0 %v775
    %1034 = vmatprep.subr.bf16.mxu0 0
    %1035 = vmatpush1.bf16.msra.mxu0 %v776
    %1036 = vmatprep.subr.bf16.mxu0 0
    %1037 = vmatpush1.bf16.msra.mxu0 %v777
    %1038 = vmatprep.subr.bf16.mxu0 0
    %1039 = vmatpush1.bf16.msra.mxu0 %v778
    %1040 = vmatprep.subr.bf16.mxu0 0
    %1041 = vmatpush1.bf16.msra.mxu0 %v779
    %1042 = vmatprep.subr.bf16.mxu0 0
    %1043 = vmatpush1.bf16.msra.mxu0 %v780
    %1044 = vmatprep.subr.bf16.mxu0 0
    %1045 = vmatpush1.bf16.msra.mxu0 %v781
    %1046 = vmatprep.mubr.bf16.mxu0 %v277
    %1047 = vmatmul.mubr.bf16.gmra.mrb[0].mxu0 %v276
    %v1048 = vpop.f32.mrb[0].mxu0
    %v1049 = vadd.f32 %v1009, %v1048
    %v1050 = vpop.f32.mrb[0].mxu0
    %v1051 = vpop.f32.mrb[0].mxu0
    %v1052 = vpop.f32.mrb[0].mxu0
    %1053 = vdwg.mxu0
    %1054 = vmatprep.subr.bf16.mxu0 0
    %1055 = vmatpush1.bf16.msra.mxu0 %v782
    %1056 = vmatprep.subr.bf16.mxu0 0
    %1057 = vmatpush1.bf16.msra.mxu0 %v783
    %1058 = vmatprep.subr.bf16.mxu0 0
    %1059 = vmatpush1.bf16.msra.mxu0 %v784
    %1060 = vmatprep.subr.bf16.mxu0 0
    %1061 = vmatpush1.bf16.msra.mxu0 %v785
    %1062 = vmatprep.subr.bf16.mxu0 0
    %1063 = vmatpush1.bf16.msra.mxu0 %v786
    %1064 = vmatprep.subr.bf16.mxu0 0
    %1065 = vmatpush1.bf16.msra.mxu0 %v787
    %1066 = vmatprep.subr.bf16.mxu0 0
    %1067 = vmatpush1.bf16.msra.mxu0 %v788
    %1068 = vmatprep.subr.bf16.mxu0 0
    %1069 = vmatpush1.bf16.msra.mxu0 %v789
    %1070 = vmatprep.subr.bf16.mxu0 0
    %1071 = vmatpush1.bf16.msra.mxu0 %v790
    %1072 = vmatprep.subr.bf16.mxu0 0
    %1073 = vmatpush1.bf16.msra.mxu0 %v791
    %1074 = vmatprep.subr.bf16.mxu0 0
    %1075 = vmatpush1.bf16.msra.mxu0 %v792
    %1076 = vmatprep.subr.bf16.mxu0 0
    %1077 = vmatpush1.bf16.msra.mxu0 %v793
    %1078 = vmatprep.subr.bf16.mxu0 0
    %1079 = vmatpush1.bf16.msra.mxu0 %v794
    %1080 = vmatprep.subr.bf16.mxu0 0
    %1081 = vmatpush1.bf16.msra.mxu0 %v795
    %1082 = vmatprep.subr.bf16.mxu0 0
    %1083 = vmatpush1.bf16.msra.mxu0 %v796
    %1084 = vmatprep.subr.bf16.mxu0 0
    %1085 = vmatpush1.bf16.msra.mxu0 %v797
    %1086 = vmatprep.mubr.bf16.mxu0 %v279
    %1087 = vmatmul.mubr.bf16.gmra.mrb[0].mxu0 %v278
    %v1088 = vpop.f32.mrb[0].mxu0
    %v1089 = vadd.f32 %v1049, %v1088
    %v1090 = vpop.f32.mrb[0].mxu0
    %v1091 = vpop.f32.mrb[0].mxu0
    %v1092 = vpop.f32.mrb[0].mxu0
    %1093 = vdwg.mxu0
    %1094 = vmatprep.subr.bf16.mxu0 0
    %1095 = vmatpush1.bf16.msra.mxu0 %v798
    %1096 = vmatprep.subr.bf16.mxu0 0
    %1097 = vmatpush1.bf16.msra.mxu0 %v799
    %1098 = vmatprep.subr.bf16.mxu0 0
    %1099 = vmatpush1.bf16.msra.mxu0 %v800
    %1100 = vmatprep.subr.bf16.mxu0 0
    %1101 = vmatpush1.bf16.msra.mxu0 %v801
    %1102 = vmatprep.subr.bf16.mxu0 0
    %1103 = vmatpush1.bf16.msra.mxu0 %v802
    %1104 = vmatprep.subr.bf16.mxu0 0
    %1105 = vmatpush1.bf16.msra.mxu0 %v803
    %1106 = vmatprep.subr.bf16.mxu0 0
    %1107 = vmatpush1.bf16.msra.mxu0 %v804
    %1108 = vmatprep.subr.bf16.mxu0 0
    %1109 = vmatpush1.bf16.msra.mxu0 %v805
    %1110 = vmatprep.subr.bf16.mxu0 0
    %1111 = vmatpush1.bf16.msra.mxu0 %v806
    %1112 = vmatprep.subr.bf16.mxu0 0
    %1113 = vmatpush1.bf16.msra.mxu0 %v807
    %1114 = vmatprep.subr.bf16.mxu0 0
    %1115 = vmatpush1.bf16.msra.mxu0 %v808
    %1116 = vmatprep.subr.bf16.mxu0 0
    %1117 = vmatpush1.bf16.msra.mxu0 %v809
    %1118 = vmatprep.subr.bf16.mxu0 0
    %1119 = vmatpush1.bf16.msra.mxu0 %v810
    %1120 = vmatprep.subr.bf16.mxu0 0
    %1121 = vmatpush1.bf16.msra.mxu0 %v811
    %1122 = vmatprep.subr.bf16.mxu0 0
    %1123 = vmatpush1.bf16.msra.mxu0 %v812
    %1124 = vmatprep.subr.bf16.mxu0 0
    %1125 = vmatpush1.bf16.msra.mxu0 %v813
    %1126 = vmatprep.mubr.bf16.mxu0 %v281
    %1127 = vmatmul.mubr.bf16.gmra.mrb[0].mxu0 %v280
    %v1128 = vpop.f32.mrb[0].mxu0
    %v1129 = vadd.f32 %v1089, %v1128
    %v1130 = vpop.f32.mrb[0].mxu0
    %v1131 = vpop.f32.mrb[0].mxu0
    %v1132 = vpop.f32.mrb[0].mxu0
    %1133 = vdwg.mxu0
    %1134 = vmatprep.subr.bf16.mxu0 0
    %1135 = vmatpush1.bf16.msra.mxu0 %v814
    %1136 = vmatprep.subr.bf16.mxu0 0
    %1137 = vmatpush1.bf16.msra.mxu0 %v815
    %1138 = vmatprep.subr.bf16.mxu0 0
    %1139 = vmatpush1.bf16.msra.mxu0 %v816
    %1140 = vmatprep.subr.bf16.mxu0 0
    %1141 = vmatpush1.bf16.msra.mxu0 %v817
    %1142 = vmatprep.subr.bf16.mxu0 0
    %1143 = vmatpush1.bf16.msra.mxu0 %v818
    %1144 = vmatprep.subr.bf16.mxu0 0
    %1145 = vmatpush1.bf16.msra.mxu0 %v819
    %1146 = vmatprep.subr.bf16.mxu0 0
    %1147 = vmatpush1.bf16.msra.mxu0 %v820
    %1148 = vmatprep.subr.bf16.mxu0 0
    %1149 = vmatpush1.bf16.msra.mxu0 %v821
    %1150 = vmatprep.subr.bf16.mxu0 0
    %1151 = vmatpush1.bf16.msra.mxu0 %v822
    %1152 = vmatprep.subr.bf16.mxu0 0
    %1153 = vmatpush1.bf16.msra.mxu0 %v823
    %1154 = vmatprep.subr.bf16.mxu0 0
    %1155 = vmatpush1.bf16.msra.mxu0 %v824
    %1156 = vmatprep.subr.bf16.mxu0 0
    %1157 = vmatpush1.bf16.msra.mxu0 %v825
    %1158 = vmatprep.subr.bf16.mxu0 0
    %1159 = vmatpush1.bf16.msra.mxu0 %v826
    %1160 = vmatprep.subr.bf16.mxu0 0
    %1161 = vmatpush1.bf16.msra.mxu0 %v827
    %1162 = vmatprep.subr.bf16.mxu0 0
    %1163 = vmatpush1.bf16.msra.mxu0 %v828
    %1164 = vmatprep.subr.bf16.mxu0 0
    %1165 = vmatpush1.bf16.msra.mxu0 %v829
    %1166 = vmatprep.mubr.bf16.mxu0 %v283
    %1167 = vmatmul.mubr.bf16.gmra.mrb[0].mxu0 %v282
    %v1168 = vpop.f32.mrb[0].mxu0
    %v1169 = vadd.f32 %v1129, %v1168
    %v1170 = vpop.f32.mrb[0].mxu0
    %v1171 = vpop.f32.mrb[0].mxu0
    %v1172 = vpop.f32.mrb[0].mxu0
    %1173 = vdwg.mxu0
    %1174 = vmatprep.subr.bf16.mxu0 0
    %1175 = vmatpush1.bf16.msra.mxu0 %v830
    %1176 = vmatprep.subr.bf16.mxu0 0
    %1177 = vmatpush1.bf16.msra.mxu0 %v831
    %1178 = vmatprep.subr.bf16.mxu0 0
    %1179 = vmatpush1.bf16.msra.mxu0 %v832
    %1180 = vmatprep.subr.bf16.mxu0 0
    %1181 = vmatpush1.bf16.msra.mxu0 %v833
    %1182 = vmatprep.subr.bf16.mxu0 0
    %1183 = vmatpush1.bf16.msra.mxu0 %v834
    %1184 = vmatprep.subr.bf16.mxu0 0
    %1185 = vmatpush1.bf16.msra.mxu0 %v835
    %1186 = vmatprep.subr.bf16.mxu0 0
    %1187 = vmatpush1.bf16.msra.mxu0 %v836
    %1188 = vmatprep.subr.bf16.mxu0 0
    %1189 = vmatpush1.bf16.msra.mxu0 %v837
    %1190 = vmatprep.subr.bf16.mxu0 0
    %1191 = vmatpush1.bf16.msra.mxu0 %v838
    %1192 = vmatprep.subr.bf16.mxu0 0
    %1193 = vmatpush1.bf16.msra.mxu0 %v839
    %1194 = vmatprep.subr.bf16.mxu0 0
    %1195 = vmatpush1.bf16.msra.mxu0 %v840
    %1196 = vmatprep.subr.bf16.mxu0 0
    %1197 = vmatpush1.bf16.msra.mxu0 %v841
    %1198 = vmatprep.subr.bf16.mxu0 0
    %1199 = vmatpush1.bf16.msra.mxu0 %v842
    %1200 = vmatprep.subr.bf16.mxu0 0
    %1201 = vmatpush1.bf16.msra.mxu0 %v843
    %1202 = vmatprep.subr.bf16.mxu0 0
    %1203 = vmatpush1.bf16.msra.mxu0 %v844
    %1204 = vmatprep.subr.bf16.mxu0 0
    %1205 = vmatpush1.bf16.msra.mxu0 %v845
    %1206 = vmatprep.mubr.bf16.mxu0 %v285
    %1207 = vmatmul.mubr.bf16.gmra.mrb[0].mxu0 %v284
    %v1208 = vpop.f32.mrb[0].mxu0
    %v1209 = vadd.f32 %v1169, %v1208
    %v1210 = vpop.f32.mrb[0].mxu0
    %v1211 = vpop.f32.mrb[0].mxu0
    %v1212 = vpop.f32.mrb[0].mxu0
    %1213 = vdwg.mxu0
    %1214 = vmatprep.subr.bf16.mxu0 0
    %1215 = vmatpush1.bf16.msra.mxu0 %v846
    %1216 = vmatprep.subr.bf16.mxu0 0
    %1217 = vmatpush1.bf16.msra.mxu0 %v847
    %1218 = vmatprep.subr.bf16.mxu0 0
    %1219 = vmatpush1.bf16.msra.mxu0 %v848
    %1220 = vmatprep.subr.bf16.mxu0 0
    %1221 = vmatpush1.bf16.msra.mxu0 %v849
    %1222 = vmatprep.subr.bf16.mxu0 0
    %1223 = vmatpush1.bf16.msra.mxu0 %v850
    %1224 = vmatprep.subr.bf16.mxu0 0
    %1225 = vmatpush1.bf16.msra.mxu0 %v851
    %1226 = vmatprep.subr.bf16.mxu0 0
    %1227 = vmatpush1.bf16.msra.mxu0 %v852
    %1228 = vmatprep.subr.bf16.mxu0 0
    %1229 = vmatpush1.bf16.msra.mxu0 %v853
    %1230 = vmatprep.subr.bf16.mxu0 0
    %1231 = vmatpush1.bf16.msra.mxu0 %v854
    %1232 = vmatprep.subr.bf16.mxu0 0
    %1233 = vmatpush1.bf16.msra.mxu0 %v855
    %1234 = vmatprep.subr.bf16.mxu0 0
    %1235 = vmatpush1.bf16.msra.mxu0 %v856
    %1236 = vmatprep.subr.bf16.mxu0 0
    %1237 = vmatpush1.bf16.msra.mxu0 %v857
    %1238 = vmatprep.subr.bf16.mxu0 0
    %1239 = vmatpush1.bf16.msra.mxu0 %v858
    %1240 = vmatprep.subr.bf16.mxu0 0
    %1241 = vmatpush1.bf16.msra.mxu0 %v859
    %1242 = vmatprep.subr.bf16.mxu0 0
    %1243 = vmatpush1.bf16.msra.mxu0 %v860
    %1244 = vmatprep.subr.bf16.mxu0 0
    %1245 = vmatpush1.bf16.msra.mxu0 %v861
    %1246 = vmatprep.mubr.bf16.mxu0 %v287
    %1247 = vmatmul.mubr.bf16.gmra.mrb[0].mxu0 %v286
    %v1248 = vpop.f32.mrb[0].mxu0
    %v1249 = vadd.f32 %v1209, %v1248
    %v1250 = vpop.f32.mrb[0].mxu0
    %v1251 = vpop.f32.mrb[0].mxu0
    %v1252 = vpop.f32.mrb[0].mxu0
    %1253 = vdwg.mxu0
    %v1254 = vld [vmem:[%s1] sm:$0xff]
    %v1255 = vld [vmem:[%s1 + $0x8] sm:$0xff]
    %v1256 = vld [vmem:[%s1 + $0x10] sm:$0xff]
    %v1257 = vld [vmem:[%s1 + $0x18] sm:$0xff]
    %v1258 = vld [vmem:[%s1 + $0x20] sm:$0xff]
    %v1259 = vld [vmem:[%s1 + $0x28] sm:$0xff]
    %v1260 = vld [vmem:[%s1 + $0x30] sm:$0xff]
    %v1268 = vunpack.c.l.b16 %v1254
    %v1269 = vunpack.c.h.b16 %v1254
    %v1270 = vunpack.c.l.b16 %v1255
    %v1271 = vunpack.c.h.b16 %v1255
    %v1272 = vunpack.c.l.b16 %v1256
    %v1273 = vunpack.c.h.b16 %v1256
    %v1274 = vunpack.c.l.b16 %v1257
    %v1275 = vunpack.c.h.b16 %v1257
    %v1276 = vunpack.c.l.b16 %v1258
    %v1277 = vunpack.c.h.b16 %v1258
    %v1278 = vunpack.c.l.b16 %v1259
    %v1279 = vunpack.c.h.b16 %v1259
    %v1280 = vunpack.c.l.b16 %v1260
    %v1281 = vunpack.c.h.b16 %v1260
    %v1282 = vpack.c.b16 %v1268, %v1268
    %v1283 = vpack.c.b16 %v1269, %v1269
    %v1284 = vpack.c.b16 %v1270, %v1270
    %v1285 = vpack.c.b16 %v1271, %v1271
    %v1286 = vpack.c.b16 %v1272, %v1272
    %v1287 = vpack.c.b16 %v1273, %v1273
    %v1288 = vpack.c.b16 %v1274, %v1274
    %v1289 = vpack.c.b16 %v1275, %v1275
    %v1290 = vpack.c.b16 %v1276, %v1276
    %v1291 = vpack.c.b16 %v1277, %v1277
    %v1292 = vpack.c.b16 %v1278, %v1278
    %v1293 = vpack.c.b16 %v1279, %v1279
    %v1294 = vpack.c.b16 %v1280, %v1280
    %v1295 = vpack.c.b16 %v1281, %v1281
    %1310 = vmatprep.subr.bf16.mxu0 0
    %1311 = vmatpush1.bf16.msra.mxu0 %v750
    %1312 = vmatprep.subr.bf16.mxu0 0
    %1313 = vmatpush1.bf16.msra.mxu0 %v751
    %1314 = vmatprep.subr.bf16.mxu0 0
    %1315 = vmatpush1.bf16.msra.mxu0 %v752
    %1316 = vmatprep.subr.bf16.mxu0 0
    %1317 = vmatpush1.bf16.msra.mxu0 %v753
    %1318 = vmatprep.subr.bf16.mxu0 0
    %1319 = vmatpush1.bf16.msra.mxu0 %v754
    %1320 = vmatprep.subr.bf16.mxu0 0
    %1321 = vmatpush1.bf16.msra.mxu0 %v755
    %1322 = vmatprep.subr.bf16.mxu0 0
    %1323 = vmatpush1.bf16.msra.mxu0 %v756
    %1324 = vmatprep.subr.bf16.mxu0 0
    %1325 = vmatpush1.bf16.msra.mxu0 %v757
    %1326 = vmatprep.subr.bf16.mxu0 0
    %1327 = vmatpush1.bf16.msra.mxu0 %v758
    %1328 = vmatprep.subr.bf16.mxu0 0
    %1329 = vmatpush1.bf16.msra.mxu0 %v759
    %1330 = vmatprep.subr.bf16.mxu0 0
    %1331 = vmatpush1.bf16.msra.mxu0 %v760
    %1332 = vmatprep.subr.bf16.mxu0 0
    %1333 = vmatpush1.bf16.msra.mxu0 %v761
    %1334 = vmatprep.subr.bf16.mxu0 0
    %1335 = vmatpush1.bf16.msra.mxu0 %v762
    %1336 = vmatprep.subr.bf16.mxu0 0
    %1337 = vmatpush1.bf16.msra.mxu0 %v763
    %1338 = vmatprep.subr.bf16.mxu0 0
    %1339 = vmatpush1.bf16.msra.mxu0 %v764
    %1340 = vmatprep.subr.bf16.mxu0 0
    %1341 = vmatpush1.bf16.msra.mxu0 %v765
    %1342 = vmatprep.mubr.bf16.mxu0 %v1283
    %1343 = vmatmul.mubr.bf16.gmra.mrb[0].mxu0 %v1282
    %v1344 = vpop.f32.mrb[0].mxu0
    %v1345 = vadd.f32 0.0, %v1344
    %v1346 = vpop.f32.mrb[0].mxu0
    %v1347 = vpop.f32.mrb[0].mxu0
    %v1348 = vpop.f32.mrb[0].mxu0
    %1349 = vdwg.mxu0
    %1350 = vmatprep.subr.bf16.mxu0 0
    %1351 = vmatpush1.bf16.msra.mxu0 %v766
    %1352 = vmatprep.subr.bf16.mxu0 0
    %1353 = vmatpush1.bf16.msra.mxu0 %v767
    %1354 = vmatprep.subr.bf16.mxu0 0
    %1355 = vmatpush1.bf16.msra.mxu0 %v768
    %1356 = vmatprep.subr.bf16.mxu0 0
    %1357 = vmatpush1.bf16.msra.mxu0 %v769
    %1358 = vmatprep.subr.bf16.mxu0 0
    %1359 = vmatpush1.bf16.msra.mxu0 %v770
    %1360 = vmatprep.subr.bf16.mxu0 0
    %1361 = vmatpush1.bf16.msra.mxu0 %v771
    %1362 = vmatprep.subr.bf16.mxu0 0
    %1363 = vmatpush1.bf16.msra.mxu0 %v772
    %1364 = vmatprep.subr.bf16.mxu0 0
    %1365 = vmatpush1.bf16.msra.mxu0 %v773
    %1366 = vmatprep.subr.bf16.mxu0 0
    %1367 = vmatpush1.bf16.msra.mxu0 %v774
    %1368 = vmatprep.subr.bf16.mxu0 0
    %1369 = vmatpush1.bf16.msra.mxu0 %v775
    %1370 = vmatprep.subr.bf16.mxu0 0
    %1371 = vmatpush1.bf16.msra.mxu0 %v776
    %1372 = vmatprep.subr.bf16.mxu0 0
    %1373 = vmatpush1.bf16.msra.mxu0 %v777
    %1374 = vmatprep.subr.bf16.mxu0 0
    %1375 = vmatpush1.bf16.msra.mxu0 %v778
    %1376 = vmatprep.subr.bf16.mxu0 0
    %1377 = vmatpush1.bf16.msra.mxu0 %v779
    %1378 = vmatprep.subr.bf16.mxu0 0
    %1379 = vmatpush1.bf16.msra.mxu0 %v780
    %1380 = vmatprep.subr.bf16.mxu0 0
    %1381 = vmatpush1.bf16.msra.mxu0 %v781
    %1382 = vmatprep.mubr.bf16.mxu0 %v1285
    %1383 = vmatmul.mubr.bf16.gmra.mrb[0].mxu0 %v1284
    %v1384 = vpop.f32.mrb[0].mxu0
    %v1385 = vadd.f32 %v1345, %v1384
    %v1386 = vpop.f32.mrb[0].mxu0
    %v1387 = vpop.f32.mrb[0].mxu0
    %v1388 = vpop.f32.mrb[0].mxu0
    %1389 = vdwg.mxu0
    %1390 = vmatprep.subr.bf16.mxu0 0
    %1391 = vmatpush1.bf16.msra.mxu0 %v782
    %1392 = vmatprep.subr.bf16.mxu0 0
    %1393 = vmatpush1.bf16.msra.mxu0 %v783
    %1394 = vmatprep.subr.bf16.mxu0 0
    %1395 = vmatpush1.bf16.msra.mxu0 %v784
    %1396 = vmatprep.subr.bf16.mxu0 0
    %1397 = vmatpush1.bf16.msra.mxu0 %v785
    %1398 = vmatprep.subr.bf16.mxu0 0
    %1399 = vmatpush1.bf16.msra.mxu0 %v786
    %1400 = vmatprep.subr.bf16.mxu0 0
    %1401 = vmatpush1.bf16.msra.mxu0 %v787
    %1402 = vmatprep.subr.bf16.mxu0 0
    %1403 = vmatpush1.bf16.msra.mxu0 %v788
    %1404 = vmatprep.subr.bf16.mxu0 0
    %1405 = vmatpush1.bf16.msra.mxu0 %v789
    %1406 = vmatprep.subr.bf16.mxu0 0
    %1407 = vmatpush1.bf16.msra.mxu0 %v790
    %1408 = vmatprep.subr.bf16.mxu0 0
    %1409 = vmatpush1.bf16.msra.mxu0 %v791
    %1410 = vmatprep.subr.bf16.mxu0 0
    %1411 = vmatpush1.bf16.msra.mxu0 %v792
    %1412 = vmatprep.subr.bf16.mxu0 0
    %1413 = vmatpush1.bf16.msra.mxu0 %v793
    %1414 = vmatprep.subr.bf16.mxu0 0
    %1415 = vmatpush1.bf16.msra.mxu0 %v794
    %1416 = vmatprep.subr.bf16.mxu0 0
    %1417 = vmatpush1.bf16.msra.mxu0 %v795
    %1418 = vmatprep.subr.bf16.mxu0 0
    %1419 = vmatpush1.bf16.msra.mxu0 %v796
    %1420 = vmatprep.subr.bf16.mxu0 0
    %1421 = vmatpush1.bf16.msra.mxu0 %v797
    %1422 = vmatprep.mubr.bf16.mxu0 %v1287
    %1423 = vmatmul.mubr.bf16.gmra.mrb[0].mxu0 %v1286
    %v1424 = vpop.f32.mrb[0].mxu0
    %v1425 = vadd.f32 %v1385, %v1424
    %v1426 = vpop.f32.mrb[0].mxu0
    %v1427 = vpop.f32.mrb[0].mxu0
    %v1428 = vpop.f32.mrb[0].mxu0
    %1429 = vdwg.mxu0
    %1430 = vmatprep.subr.bf16.mxu0 0
    %1431 = vmatpush1.bf16.msra.mxu0 %v798
    %1432 = vmatprep.subr.bf16.mxu0 0
    %1433 = vmatpush1.bf16.msra.mxu0 %v799
    %1434 = vmatprep.subr.bf16.mxu0 0
    %1435 = vmatpush1.bf16.msra.mxu0 %v800
    %1436 = vmatprep.subr.bf16.mxu0 0
    %1437 = vmatpush1.bf16.msra.mxu0 %v801
    %1438 = vmatprep.subr.bf16.mxu0 0
    %1439 = vmatpush1.bf16.msra.mxu0 %v802
    %1440 = vmatprep.subr.bf16.mxu0 0
    %1441 = vmatpush1.bf16.msra.mxu0 %v803
    %1442 = vmatprep.subr.bf16.mxu0 0
    %1443 = vmatpush1.bf16.msra.mxu0 %v804
    %1444 = vmatprep.subr.bf16.mxu0 0
    %1445 = vmatpush1.bf16.msra.mxu0 %v805
    %1446 = vmatprep.subr.bf16.mxu0 0
    %1447 = vmatpush1.bf16.msra.mxu0 %v806
    %1448 = vmatprep.subr.bf16.mxu0 0
    %1449 = vmatpush1.bf16.msra.mxu0 %v807
    %1450 = vmatprep.subr.bf16.mxu0 0
    %1451 = vmatpush1.bf16.msra.mxu0 %v808
    %1452 = vmatprep.subr.bf16.mxu0 0
    %1453 = vmatpush1.bf16.msra.mxu0 %v809
    %1454 = vmatprep.subr.bf16.mxu0 0
    %1455 = vmatpush1.bf16.msra.mxu0 %v810
    %1456 = vmatprep.subr.bf16.mxu0 0
    %1457 = vmatpush1.bf16.msra.mxu0 %v811
    %1458 = vmatprep.subr.bf16.mxu0 0
    %1459 = vmatpush1.bf16.msra.mxu0 %v812
    %1460 = vmatprep.subr.bf16.mxu0 0
    %1461 = vmatpush1.bf16.msra.mxu0 %v813
    %1462 = vmatprep.mubr.bf16.mxu0 %v1289
    %1463 = vmatmul.mubr.bf16.gmra.mrb[0].mxu0 %v1288
    %v1464 = vpop.f32.mrb[0].mxu0
    %v1465 = vadd.f32 %v1425, %v1464
    %v1466 = vpop.f32.mrb[0].mxu0
    %v1467 = vpop.f32.mrb[0].mxu0
    %v1468 = vpop.f32.mrb[0].mxu0
    %1469 = vdwg.mxu0
    %1470 = vmatprep.subr.bf16.mxu0 0
    %1471 = vmatpush1.bf16.msra.mxu0 %v814
    %1472 = vmatprep.subr.bf16.mxu0 0
    %1473 = vmatpush1.bf16.msra.mxu0 %v815
    %1474 = vmatprep.subr.bf16.mxu0 0
    %1475 = vmatpush1.bf16.msra.mxu0 %v816
    %1476 = vmatprep.subr.bf16.mxu0 0
    %1477 = vmatpush1.bf16.msra.mxu0 %v817
    %1478 = vmatprep.subr.bf16.mxu0 0
    %1479 = vmatpush1.bf16.msra.mxu0 %v818
    %1480 = vmatprep.subr.bf16.mxu0 0
    %1481 = vmatpush1.bf16.msra.mxu0 %v819
    %1482 = vmatprep.subr.bf16.mxu0 0
    %1483 = vmatpush1.bf16.msra.mxu0 %v820
    %1484 = vmatprep.subr.bf16.mxu0 0
    %1485 = vmatpush1.bf16.msra.mxu0 %v821
    %1486 = vmatprep.subr.bf16.mxu0 0
    %1487 = vmatpush1.bf16.msra.mxu0 %v822
    %1488 = vmatprep.subr.bf16.mxu0 0
    %1489 = vmatpush1.bf16.msra.mxu0 %v823
    %1490 = vmatprep.subr.bf16.mxu0 0
    %1491 = vmatpush1.bf16.msra.mxu0 %v824
    %1492 = vmatprep.subr.bf16.mxu0 0
    %1493 = vmatpush1.bf16.msra.mxu0 %v825
    %1494 = vmatprep.subr.bf16.mxu0 0
    %1495 = vmatpush1.bf16.msra.mxu0 %v826
    %1496 = vmatprep.subr.bf16.mxu0 0
    %1497 = vmatpush1.bf16.msra.mxu0 %v827
    %1498 = vmatprep.subr.bf16.mxu0 0
    %1499 = vmatpush1.bf16.msra.mxu0 %v828
    %1500 = vmatprep.subr.bf16.mxu0 0
    %1501 = vmatpush1.bf16.msra.mxu0 %v829
    %1502 = vmatprep.mubr.bf16.mxu0 %v1291
    %1503 = vmatmul.mubr.bf16.gmra.mrb[0].mxu0 %v1290
    %v1504 = vpop.f32.mrb[0].mxu0
    %v1505 = vadd.f32 %v1465, %v1504
    %v1506 = vpop.f32.mrb[0].mxu0
    %v1507 = vpop.f32.mrb[0].mxu0
    %v1508 = vpop.f32.mrb[0].mxu0
    %1509 = vdwg.mxu0
    %1510 = vmatprep.subr.bf16.mxu0 0
    %1511 = vmatpush1.bf16.msra.mxu0 %v830
    %1512 = vmatprep.subr.bf16.mxu0 0
    %1513 = vmatpush1.bf16.msra.mxu0 %v831
    %1514 = vmatprep.subr.bf16.mxu0 0
    %1515 = vmatpush1.bf16.msra.mxu0 %v832
    %1516 = vmatprep.subr.bf16.mxu0 0
    %1517 = vmatpush1.bf16.msra.mxu0 %v833
    %1518 = vmatprep.subr.bf16.mxu0 0
    %1519 = vmatpush1.bf16.msra.mxu0 %v834
    %1520 = vmatprep.subr.bf16.mxu0 0
    %1521 = vmatpush1.bf16.msra.mxu0 %v835
    %1522 = vmatprep.subr.bf16.mxu0 0
    %1523 = vmatpush1.bf16.msra.mxu0 %v836
    %1524 = vmatprep.subr.bf16.mxu0 0
    %1525 = vmatpush1.bf16.msra.mxu0 %v837
    %1526 = vmatprep.subr.bf16.mxu0 0
    %1527 = vmatpush1.bf16.msra.mxu0 %v838
    %1528 = vmatprep.subr.bf16.mxu0 0
    %1529 = vmatpush1.bf16.msra.mxu0 %v839
    %1530 = vmatprep.subr.bf16.mxu0 0
    %1531 = vmatpush1.bf16.msra.mxu0 %v840
    %1532 = vmatprep.subr.bf16.mxu0 0
    %1533 = vmatpush1.bf16.msra.mxu0 %v841
    %1534 = vmatprep.subr.bf16.mxu0 0
    %1535 = vmatpush1.bf16.msra.mxu0 %v842
    %1536 = vmatprep.subr.bf16.mxu0 0
    %1537 = vmatpush1.bf16.msra.mxu0 %v843
    %1538 = vmatprep.subr.bf16.mxu0 0
    %1539 = vmatpush1.bf16.msra.mxu0 %v844
    %1540 = vmatprep.subr.bf16.mxu0 0
    %1541 = vmatpush1.bf16.msra.mxu0 %v845
    %1542 = vmatprep.mubr.bf16.mxu0 %v1293
    %1543 = vmatmul.mubr.bf16.gmra.mrb[0].mxu0 %v1292
    %v1544 = vpop.f32.mrb[0].mxu0
    %v1545 = vadd.f32 %v1505, %v1544
    %v1546 = vpop.f32.mrb[0].mxu0
    %v1547 = vpop.f32.mrb[0].mxu0
    %v1548 = vpop.f32.mrb[0].mxu0
    %1549 = vdwg.mxu0
    %1550 = vmatprep.subr.bf16.mxu0 0
    %1551 = vmatpush1.bf16.msra.mxu0 %v846
    %1552 = vmatprep.subr.bf16.mxu0 0
    %1553 = vmatpush1.bf16.msra.mxu0 %v847
    %1554 = vmatprep.subr.bf16.mxu0 0
    %1555 = vmatpush1.bf16.msra.mxu0 %v848
    %1556 = vmatprep.subr.bf16.mxu0 0
    %1557 = vmatpush1.bf16.msra.mxu0 %v849
    %1558 = vmatprep.subr.bf16.mxu0 0
    %1559 = vmatpush1.bf16.msra.mxu0 %v850
    %1560 = vmatprep.subr.bf16.mxu0 0
    %1561 = vmatpush1.bf16.msra.mxu0 %v851
    %1562 = vmatprep.subr.bf16.mxu0 0
    %1563 = vmatpush1.bf16.msra.mxu0 %v852
    %1564 = vmatprep.subr.bf16.mxu0 0
    %1565 = vmatpush1.bf16.msra.mxu0 %v853
    %1566 = vmatprep.subr.bf16.mxu0 0
    %1567 = vmatpush1.bf16.msra.mxu0 %v854
    %1568 = vmatprep.subr.bf16.mxu0 0
    %1569 = vmatpush1.bf16.msra.mxu0 %v855
    %1570 = vmatprep.subr.bf16.mxu0 0
    %1571 = vmatpush1.bf16.msra.mxu0 %v856
    %1572 = vmatprep.subr.bf16.mxu0 0
    %1573 = vmatpush1.bf16.msra.mxu0 %v857
    %1574 = vmatprep.subr.bf16.mxu0 0
    %1575 = vmatpush1.bf16.msra.mxu0 %v858
    %1576 = vmatprep.subr.bf16.mxu0 0
    %1577 = vmatpush1.bf16.msra.mxu0 %v859
    %1578 = vmatprep.subr.bf16.mxu0 0
    %1579 = vmatpush1.bf16.msra.mxu0 %v860
    %1580 = vmatprep.subr.bf16.mxu0 0
    %1581 = vmatpush1.bf16.msra.mxu0 %v861
    %1582 = vmatprep.mubr.bf16.mxu0 %v1295
    %1583 = vmatmul.mubr.bf16.gmra.mrb[0].mxu0 %v1294
    %v1584 = vpop.f32.mrb[0].mxu0
    %v1585 = vadd.f32 %v1545, %v1584
    %v1586 = vpop.f32.mrb[0].mxu0
    %v1587 = vpop.f32.mrb[0].mxu0
    %v1588 = vpop.f32.mrb[0].mxu0
    %1589 = vdwg.mxu0
    %v1590 = vld [vmem:[%s3] sm:$0xff]
    %v1591 = vld [vmem:[%s4] sm:$0xff]
    %v1592 = vmul.f32 %v1249, %v1249
    %1593 = vadd.xlane.f32.xlu0 %v1592
    %v1594 = vpop.xlane.xlu0 %1593
    %v1595 = vadd.f32 %v1594, 1e-30
    %v1596 = vrsqrt.pop %v1595
    %v1597 = vmul.f32 %v1249, %v1596
    %v1598 = vmul.f32 %v1585, %v1585
    %1599 = vadd.xlane.f32.xlu0 %v1598
    %v1600 = vpop.xlane.xlu0 %1599
    %v1601 = vadd.f32 %v1600, 1e-30
    %v1602 = vrsqrt.pop %v1601
    %v1603 = vmul.f32 %v1585, %v1602
    %v1604 = vsub.f32 %v1591, %v1590
    %v1605 = vrot.slane %v1604, 4
    %v1606 = vadd.f32 %v1604, %v1605
    %v1607 = vrot.slane %v1606, 2
    %v1608 = vadd.f32 %v1606, %v1607
    %v1609 = vrot.slane %v1608, 1
    %v1610 = vadd.f32 %v1608, %v1609
    %v1611 = vmul.f32 %v1610, 0.125
    %v1612 = vmul.f32 %v1611, %v1611
    %1613 = vadd.xlane.f32.xlu0 %v1612
    %v1614 = vpop.xlane.xlu0 %1613
    %v1615 = vadd.f32 %v1614, 1e-30
    %v1616 = vrsqrt.pop %v1615
    %v1617 = vmul.f32 %v1611, %v1616
    %v1618 = vsub.f32 %v1603, %v1597
    %v1619 = vmul.f32 %v1618, %v1618
    %1620 = vadd.xlane.f32.xlu0 %v1619
    %v1621 = vpop.xlane.xlu0 %1620
    %v1622 = vrsqrt.pop %v1621
    %v1623 = vmul.f32 %v1621, %v1622
    %vm1624 = vcmp.eq.f32.partialorder %v1621, inf
    %v1625 = vsel %vm1624, %v1621, %v1623
    %vm1626 = vcmp.eq.f32.partialorder %v1621, 0.0
    %v1627 = vand.u32 %v1621, 2147483648
    %v1628 = vsel %vm1626, %v1627, %v1625
    %v1629 = vadd.f32 %v1628, 1e-07
    %v1630 = vrcp.pop %v1629
    %v1631 = vmul.f32 %v1618, %v1630
    %v1632 = vmul.f32 %v1631, %v1631
    %1633 = vadd.xlane.f32.xlu0 %v1632
    %v1634 = vpop.xlane.xlu0 %1633
    %v1635 = vrsqrt.pop %v1634
    %v1636 = vmul.f32 %v1634, %v1635
    %vm1637 = vcmp.eq.f32.partialorder %v1634, inf
    %v1638 = vsel %vm1637, %v1634, %v1636
    %vm1639 = vcmp.eq.f32.partialorder %v1634, 0.0
    %v1640 = vand.u32 %v1634, 2147483648
    %v1641 = vsel %vm1639, %v1640, %v1638
    %v1642 = vmul.f32 %v1617, %v1617
    %1643 = vadd.xlane.f32.xlu0 %v1642
    %v1644 = vpop.xlane.xlu0 %1643
    %v1645 = vrsqrt.pop %v1644
    %v1646 = vmul.f32 %v1644, %v1645
    %vm1647 = vcmp.eq.f32.partialorder %v1644, inf
    %v1648 = vsel %vm1647, %v1644, %v1646
    %vm1649 = vcmp.eq.f32.partialorder %v1644, 0.0
    %v1650 = vand.u32 %v1644, 2147483648
    %v1651 = vsel %vm1649, %v1650, %v1648
    %v1652 = vmul.f32 %v1641, %v1651
    %v1653 = vmax.f32 %v1652, 1e-08
    %v1654 = vmul.f32 %v1631, %v1617
    %1655 = vadd.xlane.f32.xlu0 %v1654
    %v1656 = vpop.xlane.xlu0 %1655
    %v1657 = vrcp.pop %v1653
    %v1658 = vmul.f32 %v1656, %v1657
    %v1659 = vlaneseq
    %v1660 = vshrl.u32 %v1659, 7
    %vm1661 = vcmp.lt.s32.totalorder %v1660, 2
    %v1662 = vsub.f32 1.0, %v1658
    %v1663 = vsel %vm1661, %v1662, 0.0
    %vm1664 = vcmask 7168
    %v1665 = vsel %vm1664, %v1663, 0.0
    %1666 = vadd.xlane.f32.xlu0 %v1665
    %v1667 = vpop.xlane.xlu0 %1666
    %v1668 = vrot.slane %v1667, 4
    %v1669 = vadd.f32 %v1667, %v1668
    %v1670 = vrot.slane %v1669, 2
    %v1671 = vadd.f32 %v1669, %v1670
    %v1672 = vrot.slane %v1671, 1
    %v1673 = vadd.f32 %v1671, %v1672
    %s1674 = vtos %v1673
    %s1675 = smul.f32 %s1674, 0.5
    %s1676 = scalar_lea.smem [#allocation2], 0
    %1677 = sst [smem:[%s1676]] %s1675
    // Predicated region
    $region22: #{_lambda_.1} parent=1 // pred_check
      _
    $region23: #{_lambda_.1} parent=1 // pred_check_branch
      %1679 = sbr.rel (0) target = $region25
    $region24: #{_lambda_.1} parent=1 // pred_region
      %s1681 = ssub.s32 16, 16
      %1682 = vsyncadd [#allocation3], %s1681
      %1685 = dma.smem_to_hbm [#allocation2], 16, %s5, [#allocation3]
    $region25: #{_lambda_.1} parent=1 // pred_fallthru
      _
    // Predicated region
    $region26: #{_lambda_.1} parent=1 // pred_check
      _
    $region27: #{_lambda_.1} parent=1 // pred_check_branch
      %1687 = sbr.rel (0) target = $region29
    $region28: #{_lambda_.1} parent=1 // pred_region
      %1688 = dma.done [#allocation3], 16
    $region29: #{_lambda_.1} parent=1 // pred_fallthru
      _
    %1689 = sfence
    %1690 = vsyncpa [#allocation3], 1

</llo_original>
